<compile_context>
chip_gen: v7x
topology: tpu7x:2x2x1
jax: 0.10.0
libtpu: 0.0.40
codegen_flags: <defaults>
</compile_context>

<pallas_src>
import functools
import math

import jax
import jax.numpy as jnp
from jax import lax
from jax.experimental import pallas as pl
from jax.experimental.pallas import tpu as pltpu

LN_EPS = 1e-5
NEG_INF = -1e9


def _fit_tile(dim, target):
    """Largest legal tile: `target` if it divides dim, else the full dim."""
    return target if dim % target == 0 else dim


def _gelu_new(x):
    # GPT-2 "gelu_new" (tanh approximation), computed in f32.
    return 0.5 * x * (1.0 + jnp.tanh(
        math.sqrt(2.0 / math.pi) * (x + 0.044715 * x * x * x)))


# ----------------------------------------------------------------------------
# LayerNorm (row-tiled, f32 statistics)
# ----------------------------------------------------------------------------
def _layernorm_kernel(x_ref, g_ref, b_ref, o_ref):
    x = x_ref[...].astype(jnp.float32)
    mean = jnp.mean(x, axis=-1, keepdims=True)
    var = jnp.mean(jnp.square(x - mean), axis=-1, keepdims=True)
    y = (x - mean) * lax.rsqrt(var + LN_EPS)
    y = y * g_ref[...].astype(jnp.float32) + b_ref[...].astype(jnp.float32)
    o_ref[...] = y.astype(o_ref.dtype)


def layernorm(x, gamma, beta, tm=512):
    M, E = x.shape
    tm = _fit_tile(M, tm)
    return pl.pallas_call(
        _layernorm_kernel,
        out_shape=jax.ShapeDtypeStruct((M, E), x.dtype),
        grid=(M // tm,),
        in_specs=[pl.BlockSpec((tm, E), lambda i: (i, 0)),
                  pl.BlockSpec((1, E), lambda i: (0, 0)),
                  pl.BlockSpec((1, E), lambda i: (0, 0))],
        out_specs=pl.BlockSpec((tm, E), lambda i: (i, 0)),
        compiler_params=pltpu.CompilerParams(
            dimension_semantics=("parallel",)),
    )(x, gamma.reshape(1, -1), beta.reshape(1, -1))


# ----------------------------------------------------------------------------
# Tiled matmul + bias (+ optional gelu, + optional fused residual add)
# ----------------------------------------------------------------------------
def _matmul_bias_kernel(x_ref, w_ref, b_ref, *rest, activation, has_residual):
    if has_residual:
        r_ref, o_ref, acc_ref = rest
    else:
        o_ref, acc_ref = rest

    @pl.when(pl.program_id(2) == 0)
    def _():
        acc_ref[...] = jnp.zeros_like(acc_ref)

    acc_ref[...] += jnp.dot(x_ref[...], w_ref[...],
                            preferred_element_type=jnp.float32)

    @pl.when(pl.program_id(2) == pl.num_programs(2) - 1)
    def _():
        acc = acc_ref[...] + b_ref[...].astype(jnp.float32)
        if activation == "gelu":
            acc = _gelu_new(acc)
        if has_residual:
            acc = acc + r_ref[...].astype(jnp.float32)
        o_ref[...] = acc.astype(o_ref.dtype)


def matmul_bias(x, w, b, residual=None, activation=None, out_dtype=None,
                tm=256, tn=512, tk=512):
    # GPT-2 Conv1D layout: x (M, K) @ w (K, N) + b (N,) [+ residual (M, N)]
    M, K = x.shape
    N = w.shape[1]
    tm, tn, tk = _fit_tile(M, tm), _fit_tile(N, tn), _fit_tile(K, tk)
    out_dtype = out_dtype or x.dtype

    in_specs = [pl.BlockSpec((tm, tk), lambda i, j, k: (i, k)),
                pl.BlockSpec((tk, tn), lambda i, j, k: (k, j)),
                pl.BlockSpec((1, tn), lambda i, j, k: (0, j))]
    args = [x, w, b.reshape(1, -1)]
    if residual is not None:
        in_specs.append(pl.BlockSpec((tm, tn), lambda i, j, k: (i, j)))
        args.append(residual)

    kernel = functools.partial(_matmul_bias_kernel, activation=activation,
                               has_residual=residual is not None)
    return pl.pallas_call(
        kernel,
        out_shape=jax.ShapeDtypeStruct((M, N), out_dtype),
        grid=(M // tm, N // tn, K // tk),
        in_specs=in_specs,
        out_specs=pl.BlockSpec((tm, tn), lambda i, j, k: (i, j)),
        scratch_shapes=[pltpu.VMEM((tm, tn), jnp.float32)],
        compiler_params=pltpu.CompilerParams(
            dimension_semantics=("parallel", "parallel", "arbitrary")),
    )(*args)


# ----------------------------------------------------------------------------
# Multi-head attention: fused QKV slab per batch, in-kernel causal+pad mask,
# heads looped inside the kernel, single lane-dense (S, E) output store.
# ----------------------------------------------------------------------------
def _attention_kernel(mask_ref, qkv_ref, o_ref, *, num_heads, scale):
    S = qkv_ref.shape[1]
    E = qkv_ref.shape[2] // 3
    Dh = E // num_heads

    # causal + padding mask built in-kernel (VPU, no HBM traffic), single where
    amask = mask_ref[0].astype(jnp.float32)                 # (1, S)
    rows = lax.broadcasted_iota(jnp.int32, (S, S), 0)
    cols = lax.broadcasted_iota(jnp.int32, (S, S), 1)
    keep = jnp.logical_and(cols <= rows, amask > 0.5)       # (S, S)
    bias = jnp.where(keep, 0.0, NEG_INF)                    # f32

    qkv = qkv_ref[0]                                        # (S, 3E) bf16
    outs = []
    for h in range(num_heads):
        q = qkv[:, h * Dh:(h + 1) * Dh]
        k = qkv[:, E + h * Dh:E + (h + 1) * Dh]
        v = qkv[:, 2 * E + h * Dh:2 * E + (h + 1) * Dh]
        scores = lax.dot_general(q, k, (((1,), (1,)), ((), ())),
                                 preferred_element_type=jnp.float32)
        scores = scores * scale + bias
        scores = scores - jnp.max(scores, axis=-1, keepdims=True)
        p = jnp.exp(scores)
        p = p * pl.reciprocal(jnp.sum(p, axis=-1, keepdims=True), approx=True)
        ctx = jnp.dot(p.astype(qkv.dtype), v,
                      preferred_element_type=jnp.float32)
        outs.append(ctx.astype(o_ref.dtype))
    o_ref[0] = jnp.concatenate(outs, axis=-1)               # lane-dense (S, E)


def multihead_attention(qkv, attn_mask, num_heads):
    # qkv: (B, S, 3E) bf16; attn_mask: (B, S) float (1 = keep, 0 = pad)
    B, S, threeE = qkv.shape
    E = threeE // 3
    scale = 1.0 / math.sqrt(E // num_heads)
    return pl.pallas_call(
        functools.partial(_attention_kernel, num_heads=num_heads, scale=scale),
        out_shape=jax.ShapeDtypeStruct((B, S, E), qkv.dtype),
        grid=(B,),
        in_specs=[pl.BlockSpec((1, 1, S), lambda b: (b, 0, 0)),
                  pl.BlockSpec((1, S, threeE), lambda b: (b, 0, 0))],
        out_specs=pl.BlockSpec((1, S, E), lambda b: (b, 0, 0)),
        compiler_params=pltpu.CompilerParams(
            dimension_semantics=("parallel",)),
    )(attn_mask.reshape(B, 1, S), qkv)


# ----------------------------------------------------------------------------
# SharedWeightLinear head: logits = (x @ mask^T) * shared_weight
# (scalar applied at finalize; mask stays in bf16; tiled over rows/vocab/E)
# ----------------------------------------------------------------------------
def _shared_weight_head_kernel(w_ref, x_ref, m_ref, o_ref, acc_ref):
    @pl.when(pl.program_id(2) == 0)
    def _():
        acc_ref[...] = jnp.zeros_like(acc_ref)

    acc_ref[...] += lax.dot_general(x_ref[...], m_ref[...],
                                    (((1,), (1,)), ((), ())),
                                    preferred_element_type=jnp.float32)

    @pl.when(pl.program_id(2) == pl.num_programs(2) - 1)
    def _():
        o_ref[...] = (acc_ref[...] * w_ref[0]).astype(o_ref.dtype)


def shared_weight_head(x, connection_mask, shared_weight,
                       tm=256, to=512, tk=512):
    # x: (M, E); connection_mask: (O, E); returns (M, O) f32
    M, E = x.shape
    O = connection_mask.shape[0]
    tm, to, tk = _fit_tile(M, tm), _fit_tile(O, to), _fit_tile(E, tk)
    w = jnp.asarray([shared_weight], dtype=jnp.float32)
    grid_spec = pltpu.PrefetchScalarGridSpec(
        num_scalar_prefetch=1,
        grid=(M // tm, O // to, E // tk),
        in_specs=[pl.BlockSpec((tm, tk), lambda i, j, k, w: (i, k)),
                  pl.BlockSpec((to, tk), lambda i, j, k, w: (j, k))],
        out_specs=pl.BlockSpec((tm, to), lambda i, j, k, w: (i, j)),
        scratch_shapes=[pltpu.VMEM((tm, to), jnp.float32)])
    return pl.pallas_call(
        _shared_weight_head_kernel,
        out_shape=jax.ShapeDtypeStruct((M, O), jnp.float32),
        grid_spec=grid_spec,
        compiler_params=pltpu.CompilerParams(
            dimension_semantics=("parallel", "parallel", "arbitrary")),
    )(w, x, connection_mask)


# ----------------------------------------------------------------------------
# Parameters (deterministic synthetic init — no checkpoint loading)
# ----------------------------------------------------------------------------
def init_params(key, vocab_size, embed_dim, num_layers, max_length, num_classes):
    keys = jax.random.split(key, 4 + num_layers)

    def init(k, shape, dtype=jnp.bfloat16):
        return (0.02 * jax.random.normal(k, shape, jnp.float32)).astype(dtype)

    params = {
        "wte": init(keys[0], (vocab_size, embed_dim), jnp.float32),
        "wpe": init(keys[1], (max_length, embed_dim), jnp.float32),
        "ln_f_g": jnp.ones((embed_dim,), jnp.float32),
        "ln_f_b": jnp.zeros((embed_dim,), jnp.float32),
        # binary connection masks for the weight-agnostic heads (bf16 storage)
        "lm_mask": jax.random.bernoulli(
            keys[2], 0.5, (vocab_size, embed_dim)).astype(jnp.bfloat16),
        "cls_mask": jax.random.bernoulli(
            keys[3], 0.5, (num_classes, embed_dim)).astype(jnp.bfloat16),
    }
    blocks = []
    for l in range(num_layers):
        bk = jax.random.split(keys[4 + l], 4)
        blocks.append(dict(
            ln1_g=jnp.ones((embed_dim,), jnp.float32),
            ln1_b=jnp.zeros((embed_dim,), jnp.float32),
            ln2_g=jnp.ones((embed_dim,), jnp.float32),
            ln2_b=jnp.zeros((embed_dim,), jnp.float32),
            c_attn_w=init(bk[0], (embed_dim, 3 * embed_dim)),
            c_attn_b=jnp.zeros((3 * embed_dim,), jnp.float32),
            attn_proj_w=init(bk[1], (embed_dim, embed_dim)),
            attn_proj_b=jnp.zeros((embed_dim,), jnp.float32),
            c_fc_w=init(bk[2], (embed_dim, 4 * embed_dim)),
            c_fc_b=jnp.zeros((4 * embed_dim,), jnp.float32),
            mlp_proj_w=init(bk[3], (4 * embed_dim, embed_dim)),
            mlp_proj_b=jnp.zeros((embed_dim,), jnp.float32),
        ))
    params["blocks"] = blocks
    return params


# ----------------------------------------------------------------------------
# Forward pass (glue in plain JAX, hot paths in Pallas kernels)
# ----------------------------------------------------------------------------
def gpt2_backbone(params, input_ids, attention_mask, num_heads):
    B, S = input_ids.shape
    E = params["wte"].shape[1]

    # embeddings (plain-JAX gather; dropout is identity at inference)
    h = params["wte"][input_ids] + params["wpe"][jnp.arange(S)][None, :, :]
    h = h.reshape(B * S, E).astype(jnp.bfloat16)

    if attention_mask is None:
        attention_mask = jnp.ones((B, S), jnp.float32)
    attn_mask = attention_mask.astype(jnp.float32)

    for blk in params["blocks"]:
        # --- self-attention sub-block (residual add fused into proj matmul)
        x = layernorm(h, blk["ln1_g"], blk["ln1_b"])
        qkv = matmul_bias(x, blk["c_attn_w"], blk["c_attn_b"])
        ctx = multihead_attention(qkv.reshape(B, S, 3 * E), attn_mask, num_heads)
        h = matmul_bias(ctx.reshape(B * S, E), blk["attn_proj_w"],
                        blk["attn_proj_b"], residual=h)
        # --- MLP sub-block (gelu fused, residual add fused into proj matmul)
        x = layernorm(h, blk["ln2_g"], blk["ln2_b"])
        x = matmul_bias(x, blk["c_fc_w"], blk["c_fc_b"], activation="gelu")
        h = matmul_bias(x, blk["mlp_proj_w"], blk["mlp_proj_b"], residual=h)

    h = layernorm(h, params["ln_f_g"], params["ln_f_b"])
    return h.reshape(B, S, E)


def hybrid_wann_gpt_forward(params, input_ids, attention_mask, *,
                            task="generation", shared_weight=1.0,
                            num_heads=4, vocab_size=256, max_length=32,
                            num_classes=None):
    B, S = input_ids.shape
    if task == "classification" and num_classes is not None:
        if S >= max_length:
            input_ids = input_ids[:, :max_length - 1]
            if attention_mask is not None:
                attention_mask = attention_mask[:, :max_length - 1]
            S = input_ids.shape[1]
        cls_tokens = jnp.full((B, 1), vocab_size - 1, dtype=input_ids.dtype)
        input_ids = jnp.concatenate([input_ids, cls_tokens], axis=1)
        if attention_mask is not None:
            attention_mask = jnp.concatenate(
                [attention_mask, jnp.ones((B, 1), attention_mask.dtype)], axis=1)
        S += 1

    hidden = gpt2_backbone(params, input_ids, attention_mask, num_heads)

    if task == "generation":
        logits = shared_weight_head(hidden.reshape(B * S, -1),
                                    params["lm_mask"], shared_weight)
        return logits.reshape(B, S, -1)
    elif task == "classification" and num_classes is not None:
        cls_rep = hidden[:, -1, :]                      # (B, E)
        return shared_weight_head(cls_rep, params["cls_mask"], shared_weight)
    else:
        raise ValueError(f"unsupported task: {task}")


# ----------------------------------------------------------------------------
if __name__ == "__main__":
    VOCAB, E, LAYERS, HEADS, MAXLEN, NCLS = 256, 64, 2, 4, 32, 4
    B, S = 2, 8

    key = jax.random.PRNGKey(0)
    pkey, ikey = jax.random.split(key)
    params = init_params(pkey, VOCAB, E, LAYERS, MAXLEN, NCLS)

    input_ids = jax.random.randint(ikey, (B, S), 0, VOCAB, dtype=jnp.int32)
    attention_mask = jnp.ones((B, S), jnp.float32)

    gen_fn = jax.jit(functools.partial(
        hybrid_wann_gpt_forward, task="generation", shared_weight=1.0,
        num_heads=HEADS, vocab_size=VOCAB, max_length=MAXLEN,
        num_classes=NCLS))
    cls_fn = jax.jit(functools.partial(
        hybrid_wann_gpt_forward, task="classification", shared_weight=1.0,
        num_heads=HEADS, vocab_size=VOCAB, max_length=MAXLEN,
        num_classes=NCLS))

    # generation head: (B, S, VOCAB)
    logits = jax.block_until_ready(gen_fn(params, input_ids, attention_mask))
    assert logits.shape == (B, S, VOCAB)
    assert bool(jnp.all(jnp.isfinite(logits)))

    # classification head: (B, NCLS)
    cls_logits = jax.block_until_ready(cls_fn(params, input_ids, attention_mask))
    assert cls_logits.shape == (B, NCLS)
    assert bool(jnp.all(jnp.isfinite(cls_logits)))

    print("KERNEL_OK")
</pallas_src>

<mosaic_0001>
module attributes {stable_mosaic.version = 11 : i64} {
  func.func @_layernorm_kernel(%arg0: i32, %arg1: memref<16x64xbf16, #tpu.memory_space<vmem>>, %arg2: memref<1x64xf32, #tpu.memory_space<vmem>>, %arg3: memref<1x64xf32, #tpu.memory_space<vmem>>, %arg4: memref<16x64xbf16, #tpu.memory_space<vmem>>) attributes {dimension_semantics = [#tpu.dimension_semantics<parallel>], iteration_bounds = array<i64: 1>, scalar_prefetch = 0 : i64, scratch_operands = 0 : i64, tpu.core_type = #tpu.core_type<tc>, window_params = [{transform_indices = @transform_0, window_bounds = array<i64: 16, 64>}, {pipeline_mode = #tpu.pipeline_mode<synchronous>, transform_indices = @transform_1, window_bounds = array<i64: 1, 64>}, {pipeline_mode = #tpu.pipeline_mode<synchronous>, transform_indices = @transform_2, window_bounds = array<i64: 1, 64>}, {transform_indices = @transform_3, window_bounds = array<i64: 16, 64>}]} {
    %c0 = arith.constant 0 : index
    %c0_0 = arith.constant 0 : index
    %0 = vector.load %arg1[%c0, %c0_0] : memref<16x64xbf16, #tpu.memory_space<vmem>>, vector<16x64xbf16>
    %1 = arith.extf %0 : vector<16x64xbf16> to vector<16x64xf32>
    %cst = arith.constant dense<0.000000e+00> : vector<16xf32>
    %2 = vector.multi_reduction <add>, %1, %cst [1] : vector<16x64xf32> to vector<16xf32>
    %3 = vector.shape_cast %2 : vector<16xf32> to vector<16x1xf32>
    %cst_1 = arith.constant 6.400000e+01 : f32
    %4 = vector.broadcast %cst_1 : f32 to vector<16x1xf32>
    %5 = arith.divf %3, %4 : vector<16x1xf32>
    %6 = vector.broadcast %5 : vector<16x1xf32> to vector<16x64xf32>
    %7 = arith.subf %1, %6 : vector<16x64xf32>
    %8 = arith.mulf %7, %7 : vector<16x64xf32>
    %cst_2 = arith.constant dense<0.000000e+00> : vector<16xf32>
    %9 = vector.multi_reduction <add>, %8, %cst_2 [1] : vector<16x64xf32> to vector<16xf32>
    %10 = vector.shape_cast %9 : vector<16xf32> to vector<16x1xf32>
    %cst_3 = arith.constant 6.400000e+01 : f32
    %11 = vector.broadcast %cst_3 : f32 to vector<16x1xf32>
    %12 = arith.divf %10, %11 : vector<16x1xf32>
    %13 = vector.broadcast %5 : vector<16x1xf32> to vector<16x64xf32>
    %14 = arith.subf %1, %13 : vector<16x64xf32>
    %cst_4 = arith.constant 9.99999974E-6 : f32
    %15 = vector.broadcast %cst_4 : f32 to vector<16x1xf32>
    %16 = arith.addf %12, %15 : vector<16x1xf32>
    %17 = math.rsqrt %16 : vector<16x1xf32>
    %18 = vector.broadcast %17 : vector<16x1xf32> to vector<16x64xf32>
    %19 = arith.mulf %14, %18 : vector<16x64xf32>
    %c0_5 = arith.constant 0 : index
    %c0_6 = arith.constant 0 : index
    %20 = vector.load %arg2[%c0_5, %c0_6] : memref<1x64xf32, #tpu.memory_space<vmem>>, vector<1x64xf32>
    %21 = vector.broadcast %20 : vector<1x64xf32> to vector<16x64xf32>
    %22 = arith.mulf %19, %21 : vector<16x64xf32>
    %c0_7 = arith.constant 0 : index
    %c0_8 = arith.constant 0 : index
    %23 = vector.load %arg3[%c0_7, %c0_8] : memref<1x64xf32, #tpu.memory_space<vmem>>, vector<1x64xf32>
    %24 = vector.broadcast %23 : vector<1x64xf32> to vector<16x64xf32>
    %25 = arith.addf %22, %24 : vector<16x64xf32>
    %26 = arith.truncf %25 : vector<16x64xf32> to vector<16x64xbf16>
    %c0_9 = arith.constant 0 : index
    %c0_10 = arith.constant 0 : index
    %27 = vector.load %arg4[%c0_9, %c0_10] : memref<16x64xbf16, #tpu.memory_space<vmem>>, vector<16x64xbf16>
    tpu.vector_store %arg4[%c0_9, %c0_10], %26 {strides = array<i32>} : memref<16x64xbf16, #tpu.memory_space<vmem>>, vector<16x64xbf16>,
    return
  }
  func.func @transform_0(%arg0: i32) -> (i32, i32) {
    %c0_i32 = arith.constant 0 : i32
    %c0_i32_0 = arith.constant 0 : i32
    return %arg0, %c0_i32 : i32, i32
  }
  func.func @transform_1(%arg0: i32) -> (i32, i32) {
    %c0_i32 = arith.constant 0 : i32
    %c0_i32_0 = arith.constant 0 : i32
    %c0_i32_1 = arith.constant 0 : i32
    return %c0_i32, %c0_i32_0 : i32, i32
  }
  func.func @transform_2(%arg0: i32) -> (i32, i32) {
    %c0_i32 = arith.constant 0 : i32
    %c0_i32_0 = arith.constant 0 : i32
    %c0_i32_1 = arith.constant 0 : i32
    return %c0_i32, %c0_i32_0 : i32, i32
  }
  func.func @transform_3(%arg0: i32) -> (i32, i32) {
    %c0_i32 = arith.constant 0 : i32
    %c0_i32_0 = arith.constant 0 : i32
    return %arg0, %c0_i32 : i32, i32
  }
}

module attributes {stable_mosaic.version = 11 : i64} {
  func.func @_matmul_bias_kernel(%arg0: i32, %arg1: i32, %arg2: i32, %arg3: memref<16x64xbf16, #tpu.memory_space<vmem>>, %arg4: memref<64x192xbf16, #tpu.memory_space<vmem>>, %arg5: memref<1x192xf32, #tpu.memory_space<vmem>>, %arg6: memref<16x192xbf16, #tpu.memory_space<vmem>>, %arg7: memref<16x192xf32, #tpu.memory_space<vmem>>) attributes {dimension_semantics = [#tpu.dimension_semantics<parallel>, #tpu.dimension_semantics<parallel>, #tpu.dimension_semantics<arbitrary>], iteration_bounds = array<i64: 1, 1, 1>, scalar_prefetch = 0 : i64, scratch_operands = 1 : i64, tpu.core_type = #tpu.core_type<tc>, window_params = [{transform_indices = @transform_0, window_bounds = array<i64: 16, 64>}, {transform_indices = @transform_1, window_bounds = array<i64: 64, 192>}, {transform_indices = @transform_2, window_bounds = array<i64: 1, 192>}, {transform_indices = @transform_3, window_bounds = array<i64: 16, 192>}]} {
    %c0_i32 = arith.constant 0 : i32
    %0 = arith.cmpi eq, %arg2, %c0_i32 : i32
    %1 = arith.extui %0 : i1 to i32
    %c0_i32_0 = arith.constant 0 : i32
    %2 = arith.cmpi ne, %1, %c0_i32_0 : i32
    scf.if %2 {
      %cst_10 = arith.constant 0.000000e+00 : f32
      %12 = vector.broadcast %cst_10 : f32 to vector<16x192xf32>
      %c0_11 = arith.constant 0 : index
      %c0_12 = arith.constant 0 : index
      %13 = vector.load %arg7[%c0_11, %c0_12] : memref<16x192xf32, #tpu.memory_space<vmem>>, vector<16x192xf32>
      tpu.vector_store %arg7[%c0_11, %c0_12], %12 {strides = array<i32>} : memref<16x192xf32, #tpu.memory_space<vmem>>, vector<16x192xf32>,
    } else {
    }
    %c0 = arith.constant 0 : index
    %c0_1 = arith.constant 0 : index
    %3 = vector.load %arg7[%c0, %c0_1] : memref<16x192xf32, #tpu.memory_space<vmem>>, vector<16x192xf32>
    %c0_2 = arith.constant 0 : index
    %c0_3 = arith.constant 0 : index
    %4 = vector.load %arg3[%c0_2, %c0_3] : memref<16x64xbf16, #tpu.memory_space<vmem>>, vector<16x64xbf16>
    %c0_4 = arith.constant 0 : index
    %c0_5 = arith.constant 0 : index
    %5 = vector.load %arg4[%c0_4, %c0_5] : memref<64x192xbf16, #tpu.memory_space<vmem>>, vector<64x192xbf16>
    %cst = arith.constant dense<0.000000e+00> : vector<16x192xf32>
    %6 = tpu.matmul %4, %5, %cst {dimension_numbers = #tpu.dot_dimension_numbers<[1], [0], [0], [1], [0, 0, 1, 1], [], []>} : vector<16x64xbf16>, vector<64x192xbf16>, vector<16x192xf32> -> vector<16x192xf32>
    %7 = arith.addf %3, %6 : vector<16x192xf32>
    %c0_6 = arith.constant 0 : index
    %c0_7 = arith.constant 0 : index
    %8 = vector.load %arg7[%c0_6, %c0_7] : memref<16x192xf32, #tpu.memory_space<vmem>>, vector<16x192xf32>
    tpu.vector_store %arg7[%c0_6, %c0_7], %7 {strides = array<i32>} : memref<16x192xf32, #tpu.memory_space<vmem>>, vector<16x192xf32>,
    %c0_i32_8 = arith.constant 0 : i32
    %9 = arith.cmpi eq, %arg2, %c0_i32_8 : i32
    %10 = arith.extui %9 : i1 to i32
    %c0_i32_9 = arith.constant 0 : i32
    %11 = arith.cmpi ne, %10, %c0_i32_9 : i32
    scf.if %11 {
      %c0_10 = arith.constant 0 : index
      %c0_11 = arith.constant 0 : index
      %12 = vector.load %arg7[%c0_10, %c0_11] : memref<16x192xf32, #tpu.memory_space<vmem>>, vector<16x192xf32>
      %c0_12 = arith.constant 0 : index
      %c0_13 = arith.constant 0 : index
      %13 = vector.load %arg5[%c0_12, %c0_13] : memref<1x192xf32, #tpu.memory_space<vmem>>, vector<1x192xf32>
      %14 = vector.broadcast %13 : vector<1x192xf32> to vector<16x192xf32>
      %15 = arith.addf %12, %14 : vector<16x192xf32>
      %16 = arith.truncf %15 : vector<16x192xf32> to vector<16x192xbf16>
      %c0_14 = arith.constant 0 : index
      %c0_15 = arith.constant 0 : index
      %17 = vector.load %arg6[%c0_14, %c0_15] : memref<16x192xbf16, #tpu.memory_space<vmem>>, vector<16x192xbf16>
      tpu.vector_store %arg6[%c0_14, %c0_15], %16 {strides = array<i32>} : memref<16x192xbf16, #tpu.memory_space<vmem>>, vector<16x192xbf16>,
    } else {
    }
    return
  }
  func.func @transform_0(%arg0: i32, %arg1: i32, %arg2: i32) -> (i32, i32) {
    %c0_i32 = arith.constant 0 : i32
    return %arg0, %arg2 : i32, i32
  }
  func.func @transform_1(%arg0: i32, %arg1: i32, %arg2: i32) -> (i32, i32) {
    %c0_i32 = arith.constant 0 : i32
    return %arg2, %arg1 : i32, i32
  }
  func.func @transform_2(%arg0: i32, %arg1: i32, %arg2: i32) -> (i32, i32) {
    %c0_i32 = arith.constant 0 : i32
    %c0_i32_0 = arith.constant 0 : i32
    return %c0_i32, %arg1 : i32, i32
  }
  func.func @transform_3(%arg0: i32, %arg1: i32, %arg2: i32) -> (i32, i32) {
    %c0_i32 = arith.constant 0 : i32
    return %arg0, %arg1 : i32, i32
  }
}

module attributes {stable_mosaic.version = 11 : i64} {
  func.func @_attention_kernel(%arg0: i32, %arg1: memref<1x1x8xf32, #tpu.memory_space<vmem>>, %arg2: memref<1x8x192xbf16, #tpu.memory_space<vmem>>, %arg3: memref<1x8x64xbf16, #tpu.memory_space<vmem>>) attributes {dimension_semantics = [#tpu.dimension_semantics<parallel>], iteration_bounds = array<i64: 2>, scalar_prefetch = 0 : i64, scratch_operands = 0 : i64, tpu.core_type = #tpu.core_type<tc>, window_params = [{transform_indices = @transform_0, window_bounds = array<i64: 1, 1, 8>}, {transform_indices = @transform_1, window_bounds = array<i64: 1, 8, 192>}, {transform_indices = @transform_2, window_bounds = array<i64: 1, 8, 64>}]} {
    %c0 = arith.constant 0 : index
    %c0_0 = arith.constant 0 : index
    %c0_1 = arith.constant 0 : index
    %0 = vector.load %arg1[%c0, %c0_0, %c0_1] : memref<1x1x8xf32, #tpu.memory_space<vmem>>, vector<1x1x8xf32>
    %1 = vector.shape_cast %0 : vector<1x1x8xf32> to vector<1x8xf32>
    %2 = tpu.iota {dimensions = array<i32: 0>} : vector<8x8xi32>
    %3 = tpu.iota {dimensions = array<i32: 1>} : vector<8x8xi32>
    %4 = arith.cmpi sle, %3, %2 : vector<8x8xi32>
    %cst = arith.constant 5.000000e-01 : f32
    %5 = vector.broadcast %cst : f32 to vector<1x8xf32>
    %6 = arith.cmpf ogt, %1, %5 : vector<1x8xf32>
    %7 = vector.broadcast %6 : vector<1x8xi1> to vector<8x8xi1>
    %8 = arith.andi %4, %7 : vector<8x8xi1>
    %cst_2 = arith.constant 0.000000e+00 : f32
    %cst_3 = arith.constant -1.000000e+09 : f32
    %9 = vector.broadcast %cst_2 : f32 to vector<8x8xf32>
    %10 = vector.broadcast %cst_3 : f32 to vector<8x8xf32>
    %11 = arith.select %8, %9, %10 : vector<8x8xi1>, vector<8x8xf32>
    %c0_4 = arith.constant 0 : index
    %c0_5 = arith.constant 0 : index
    %c0_6 = arith.constant 0 : index
    %12 = vector.load %arg2[%c0_4, %c0_5, %c0_6] : memref<1x8x192xbf16, #tpu.memory_space<vmem>>, vector<1x8x192xbf16>
    %13 = vector.shape_cast %12 : vector<1x8x192xbf16> to vector<8x192xbf16>
    %14 = vector.extract_strided_slice %13 {offsets = [0, 0], sizes = [8, 16], strides = [1, 1]} : vector<8x192xbf16> to vector<8x16xbf16>
    %15 = vector.extract_strided_slice %13 {offsets = [0, 64], sizes = [8, 16], strides = [1, 1]} : vector<8x192xbf16> to vector<8x16xbf16>
    %16 = vector.extract_strided_slice %13 {offsets = [0, 128], sizes = [8, 16], strides = [1, 1]} : vector<8x192xbf16> to vector<8x16xbf16>
    %cst_7 = arith.constant dense<0.000000e+00> : vector<8x8xf32>
    %17 = tpu.matmul %14, %15, %cst_7 {dimension_numbers = #tpu.dot_dimension_numbers<[1], [1], [0], [0], [0, 0, 1, 0], [], []>} : vector<8x16xbf16>, vector<8x16xbf16>, vector<8x8xf32> -> vector<8x8xf32>
    %cst_8 = arith.constant 2.500000e-01 : f32
    %18 = vector.broadcast %cst_8 : f32 to vector<8x8xf32>
    %19 = arith.mulf %17, %18 : vector<8x8xf32>
    %20 = arith.addf %19, %11 : vector<8x8xf32>
    %cst_9 = arith.constant dense<0xFF800000> : vector<8xf32>
    %21 = vector.multi_reduction <maximumf>, %20, %cst_9 [1] : vector<8x8xf32> to vector<8xf32>
    %22 = vector.shape_cast %21 : vector<8xf32> to vector<8x1xf32>
    %23 = vector.broadcast %22 : vector<8x1xf32> to vector<8x8xf32>
    %24 = arith.subf %20, %23 : vector<8x8xf32>
    %25 = math.exp %24 : vector<8x8xf32>
    %cst_10 = arith.constant dense<0.000000e+00> : vector<8xf32>
    %26 = vector.multi_reduction <add>, %25, %cst_10 [1] : vector<8x8xf32> to vector<8xf32>
    %27 = vector.shape_cast %26 : vector<8xf32> to vector<8x1xf32>
    %28 = tpu.reciprocal %27 {approx = true} : vector<8x1xf32> -> vector<8x1xf32>
    %29 = vector.broadcast %28 : vector<8x1xf32> to vector<8x8xf32>
    %30 = arith.mulf %25, %29 : vector<8x8xf32>
    %31 = arith.truncf %30 : vector<8x8xf32> to vector<8x8xbf16>
    %cst_11 = arith.constant dense<0.000000e+00> : vector<8x16xf32>
    %32 = tpu.matmul %31, %16, %cst_11 {dimension_numbers = #tpu.dot_dimension_numbers<[1], [0], [0], [1], [0, 0, 1, 1], [], []>} : vector<8x8xbf16>, vector<8x16xbf16>, vector<8x16xf32> -> vector<8x16xf32>
    %33 = arith.truncf %32 : vector<8x16xf32> to vector<8x16xbf16>
    %34 = vector.extract_strided_slice %13 {offsets = [0, 16], sizes = [8, 16], strides = [1, 1]} : vector<8x192xbf16> to vector<8x16xbf16>
    %35 = vector.extract_strided_slice %13 {offsets = [0, 80], sizes = [8, 16], strides = [1, 1]} : vector<8x192xbf16> to vector<8x16xbf16>
    %36 = vector.extract_strided_slice %13 {offsets = [0, 144], sizes = [8, 16], strides = [1, 1]} : vector<8x192xbf16> to vector<8x16xbf16>
    %cst_12 = arith.constant dense<0.000000e+00> : vector<8x8xf32>
    %37 = tpu.matmul %34, %35, %cst_12 {dimension_numbers = #tpu.dot_dimension_numbers<[1], [1], [0], [0], [0, 0, 1, 0], [], []>} : vector<8x16xbf16>, vector<8x16xbf16>, vector<8x8xf32> -> vector<8x8xf32>
    %cst_13 = arith.constant 2.500000e-01 : f32
    %38 = vector.broadcast %cst_13 : f32 to vector<8x8xf32>
    %39 = arith.mulf %37, %38 : vector<8x8xf32>
    %40 = arith.addf %39, %11 : vector<8x8xf32>
    %cst_14 = arith.constant dense<0xFF800000> : vector<8xf32>
    %41 = vector.multi_reduction <maximumf>, %40, %cst_14 [1] : vector<8x8xf32> to vector<8xf32>
    %42 = vector.shape_cast %41 : vector<8xf32> to vector<8x1xf32>
    %43 = vector.broadcast %42 : vector<8x1xf32> to vector<8x8xf32>
    %44 = arith.subf %40, %43 : vector<8x8xf32>
    %45 = math.exp %44 : vector<8x8xf32>
    %cst_15 = arith.constant dense<0.000000e+00> : vector<8xf32>
    %46 = vector.multi_reduction <add>, %45, %cst_15 [1] : vector<8x8xf32> to vector<8xf32>
    %47 = vector.shape_cast %46 : vector<8xf32> to vector<8x1xf32>
    %48 = tpu.reciprocal %47 {approx = true} : vector<8x1xf32> -> vector<8x1xf32>
    %49 = vector.broadcast %48 : vector<8x1xf32> to vector<8x8xf32>
    %50 = arith.mulf %45, %49 : vector<8x8xf32>
    %51 = arith.truncf %50 : vector<8x8xf32> to vector<8x8xbf16>
    %cst_16 = arith.constant dense<0.000000e+00> : vector<8x16xf32>
    %52 = tpu.matmul %51, %36, %cst_16 {dimension_numbers = #tpu.dot_dimension_numbers<[1], [0], [0], [1], [0, 0, 1, 1], [], []>} : vector<8x8xbf16>, vector<8x16xbf16>, vector<8x16xf32> -> vector<8x16xf32>
    %53 = arith.truncf %52 : vector<8x16xf32> to vector<8x16xbf16>
    %54 = vector.extract_strided_slice %13 {offsets = [0, 32], sizes = [8, 16], strides = [1, 1]} : vector<8x192xbf16> to vector<8x16xbf16>
    %55 = vector.extract_strided_slice %13 {offsets = [0, 96], sizes = [8, 16], strides = [1, 1]} : vector<8x192xbf16> to vector<8x16xbf16>
    %56 = vector.extract_strided_slice %13 {offsets = [0, 160], sizes = [8, 16], strides = [1, 1]} : vector<8x192xbf16> to vector<8x16xbf16>
    %cst_17 = arith.constant dense<0.000000e+00> : vector<8x8xf32>
    %57 = tpu.matmul %54, %55, %cst_17 {dimension_numbers = #tpu.dot_dimension_numbers<[1], [1], [0], [0], [0, 0, 1, 0], [], []>} : vector<8x16xbf16>, vector<8x16xbf16>, vector<8x8xf32> -> vector<8x8xf32>
    %cst_18 = arith.constant 2.500000e-01 : f32
    %58 = vector.broadcast %cst_18 : f32 to vector<8x8xf32>
    %59 = arith.mulf %57, %58 : vector<8x8xf32>
    %60 = arith.addf %59, %11 : vector<8x8xf32>
    %cst_19 = arith.constant dense<0xFF800000> : vector<8xf32>
    %61 = vector.multi_reduction <maximumf>, %60, %cst_19 [1] : vector<8x8xf32> to vector<8xf32>
    %62 = vector.shape_cast %61 : vector<8xf32> to vector<8x1xf32>
    %63 = vector.broadcast %62 : vector<8x1xf32> to vector<8x8xf32>
    %64 = arith.subf %60, %63 : vector<8x8xf32>
    %65 = math.exp %64 : vector<8x8xf32>
    %cst_20 = arith.constant dense<0.000000e+00> : vector<8xf32>
    %66 = vector.multi_reduction <add>, %65, %cst_20 [1] : vector<8x8xf32> to vector<8xf32>
    %67 = vector.shape_cast %66 : vector<8xf32> to vector<8x1xf32>
    %68 = tpu.reciprocal %67 {approx = true} : vector<8x1xf32> -> vector<8x1xf32>
    %69 = vector.broadcast %68 : vector<8x1xf32> to vector<8x8xf32>
    %70 = arith.mulf %65, %69 : vector<8x8xf32>
    %71 = arith.truncf %70 : vector<8x8xf32> to vector<8x8xbf16>
    %cst_21 = arith.constant dense<0.000000e+00> : vector<8x16xf32>
    %72 = tpu.matmul %71, %56, %cst_21 {dimension_numbers = #tpu.dot_dimension_numbers<[1], [0], [0], [1], [0, 0, 1, 1], [], []>} : vector<8x8xbf16>, vector<8x16xbf16>, vector<8x16xf32> -> vector<8x16xf32>
    %73 = arith.truncf %72 : vector<8x16xf32> to vector<8x16xbf16>
    %74 = vector.extract_strided_slice %13 {offsets = [0, 48], sizes = [8, 16], strides = [1, 1]} : vector<8x192xbf16> to vector<8x16xbf16>
    %75 = vector.extract_strided_slice %13 {offsets = [0, 112], sizes = [8, 16], strides = [1, 1]} : vector<8x192xbf16> to vector<8x16xbf16>
    %76 = vector.extract_strided_slice %13 {offsets = [0, 176], sizes = [8, 16], strides = [1, 1]} : vector<8x192xbf16> to vector<8x16xbf16>
    %cst_22 = arith.constant dense<0.000000e+00> : vector<8x8xf32>
    %77 = tpu.matmul %74, %75, %cst_22 {dimension_numbers = #tpu.dot_dimension_numbers<[1], [1], [0], [0], [0, 0, 1, 0], [], []>} : vector<8x16xbf16>, vector<8x16xbf16>, vector<8x8xf32> -> vector<8x8xf32>
    %cst_23 = arith.constant 2.500000e-01 : f32
    %78 = vector.broadcast %cst_23 : f32 to vector<8x8xf32>
    %79 = arith.mulf %77, %78 : vector<8x8xf32>
    %80 = arith.addf %79, %11 : vector<8x8xf32>
    %cst_24 = arith.constant dense<0xFF800000> : vector<8xf32>
    %81 = vector.multi_reduction <maximumf>, %80, %cst_24 [1] : vector<8x8xf32> to vector<8xf32>
    %82 = vector.shape_cast %81 : vector<8xf32> to vector<8x1xf32>
    %83 = vector.broadcast %82 : vector<8x1xf32> to vector<8x8xf32>
    %84 = arith.subf %80, %83 : vector<8x8xf32>
    %85 = math.exp %84 : vector<8x8xf32>
    %cst_25 = arith.constant dense<0.000000e+00> : vector<8xf32>
    %86 = vector.multi_reduction <add>, %85, %cst_25 [1] : vector<8x8xf32> to vector<8xf32>
    %87 = vector.shape_cast %86 : vector<8xf32> to vector<8x1xf32>
    %88 = tpu.reciprocal %87 {approx = true} : vector<8x1xf32> -> vector<8x1xf32>
    %89 = vector.broadcast %88 : vector<8x1xf32> to vector<8x8xf32>
    %90 = arith.mulf %85, %89 : vector<8x8xf32>
    %91 = arith.truncf %90 : vector<8x8xf32> to vector<8x8xbf16>
    %cst_26 = arith.constant dense<0.000000e+00> : vector<8x16xf32>
    %92 = tpu.matmul %91, %76, %cst_26 {dimension_numbers = #tpu.dot_dimension_numbers<[1], [0], [0], [1], [0, 0, 1, 1], [], []>} : vector<8x8xbf16>, vector<8x16xbf16>, vector<8x16xf32> -> vector<8x16xf32>
    %93 = arith.truncf %92 : vector<8x16xf32> to vector<8x16xbf16>
    %94 = tpu.concatenate %33, %53, %73, %93 in 1 : vector<8x16xbf16>, vector<8x16xbf16>, vector<8x16xbf16>, vector<8x16xbf16> -> vector<8x64xbf16>
    %c0_27 = arith.constant 0 : index
    %c0_28 = arith.constant 0 : index
    %c0_29 = arith.constant 0 : index
    %95 = vector.load %arg3[%c0_27, %c0_28, %c0_29] : memref<1x8x64xbf16, #tpu.memory_space<vmem>>, vector<1x8x64xbf16>
    %96 = vector.shape_cast %95 : vector<1x8x64xbf16> to vector<8x64xbf16>
    %97 = vector.shape_cast %94 : vector<8x64xbf16> to vector<1x8x64xbf16>
    tpu.vector_store %arg3[%c0_27, %c0_28, %c0_29], %97 {strides = array<i32>} : memref<1x8x64xbf16, #tpu.memory_space<vmem>>, vector<1x8x64xbf16>,
    return
  }
  func.func @transform_0(%arg0: i32) -> (i32, i32, i32) {
    %c0_i32 = arith.constant 0 : i32
    %c0_i32_0 = arith.constant 0 : i32
    %c0_i32_1 = arith.constant 0 : i32
    return %arg0, %c0_i32, %c0_i32_0 : i32, i32, i32
  }
  func.func @transform_1(%arg0: i32) -> (i32, i32, i32) {
    %c0_i32 = arith.constant 0 : i32
    %c0_i32_0 = arith.constant 0 : i32
    %c0_i32_1 = arith.constant 0 : i32
    return %arg0, %c0_i32, %c0_i32_0 : i32, i32, i32
  }
  func.func @transform_2(%arg0: i32) -> (i32, i32, i32) {
    %c0_i32 = arith.constant 0 : i32
    %c0_i32_0 = arith.constant 0 : i32
    %c0_i32_1 = arith.constant 0 : i32
    return %arg0, %c0_i32, %c0_i32_0 : i32, i32, i32
  }
}

module attributes {stable_mosaic.version = 11 : i64} {
  func.func @_matmul_bias_kernel(%arg0: i32, %arg1: i32, %arg2: i32, %arg3: memref<16x64xbf16, #tpu.memory_space<vmem>>, %arg4: memref<64x64xbf16, #tpu.memory_space<vmem>>, %arg5: memref<1x64xf32, #tpu.memory_space<vmem>>, %arg6: memref<16x64xbf16, #tpu.memory_space<vmem>>, %arg7: memref<16x64xbf16, #tpu.memory_space<vmem>>, %arg8: memref<16x64xf32, #tpu.memory_space<vmem>>) attributes {dimension_semantics = [#tpu.dimension_semantics<parallel>, #tpu.dimension_semantics<parallel>, #tpu.dimension_semantics<arbitrary>], iteration_bounds = array<i64: 1, 1, 1>, scalar_prefetch = 0 : i64, scratch_operands = 1 : i64, tpu.core_type = #tpu.core_type<tc>, window_params = [{transform_indices = @transform_0, window_bounds = array<i64: 16, 64>}, {transform_indices = @transform_1, window_bounds = array<i64: 64, 64>}, {transform_indices = @transform_2, window_bounds = array<i64: 1, 64>}, {transform_indices = @transform_3, window_bounds = array<i64: 16, 64>}, {transform_indices = @transform_4, window_bounds = array<i64: 16, 64>}]} {
    %c0_i32 = arith.constant 0 : i32
    %0 = arith.cmpi eq, %arg2, %c0_i32 : i32
    %1 = arith.extui %0 : i1 to i32
    %c0_i32_0 = arith.constant 0 : i32
    %2 = arith.cmpi ne, %1, %c0_i32_0 : i32
    scf.if %2 {
      %cst_10 = arith.constant 0.000000e+00 : f32
      %12 = vector.broadcast %cst_10 : f32 to vector<16x64xf32>
      %c0_11 = arith.constant 0 : index
      %c0_12 = arith.constant 0 : index
      %13 = vector.load %arg8[%c0_11, %c0_12] : memref<16x64xf32, #tpu.memory_space<vmem>>, vector<16x64xf32>
      tpu.vector_store %arg8[%c0_11, %c0_12], %12 {strides = array<i32>} : memref<16x64xf32, #tpu.memory_space<vmem>>, vector<16x64xf32>,
    } else {
    }
    %c0 = arith.constant 0 : index
    %c0_1 = arith.constant 0 : index
    %3 = vector.load %arg8[%c0, %c0_1] : memref<16x64xf32, #tpu.memory_space<vmem>>, vector<16x64xf32>
    %c0_2 = arith.constant 0 : index
    %c0_3 = arith.constant 0 : index
    %4 = vector.load %arg3[%c0_2, %c0_3] : memref<16x64xbf16, #tpu.memory_space<vmem>>, vector<16x64xbf16>
    %c0_4 = arith.constant 0 : index
    %c0_5 = arith.constant 0 : index
    %5 = vector.load %arg4[%c0_4, %c0_5] : memref<64x64xbf16, #tpu.memory_space<vmem>>, vector<64x64xbf16>
    %cst = arith.constant dense<0.000000e+00> : vector<16x64xf32>
    %6 = tpu.matmul %4, %5, %cst {dimension_numbers = #tpu.dot_dimension_numbers<[1], [0], [0], [1], [0, 0, 1, 1], [], []>} : vector<16x64xbf16>, vector<64x64xbf16>, vector<16x64xf32> -> vector<16x64xf32>
    %7 = arith.addf %3, %6 : vector<16x64xf32>
    %c0_6 = arith.constant 0 : index
    %c0_7 = arith.constant 0 : index
    %8 = vector.load %arg8[%c0_6, %c0_7] : memref<16x64xf32, #tpu.memory_space<vmem>>, vector<16x64xf32>
    tpu.vector_store %arg8[%c0_6, %c0_7], %7 {strides = array<i32>} : memref<16x64xf32, #tpu.memory_space<vmem>>, vector<16x64xf32>,
    %c0_i32_8 = arith.constant 0 : i32
    %9 = arith.cmpi eq, %arg2, %c0_i32_8 : i32
    %10 = arith.extui %9 : i1 to i32
    %c0_i32_9 = arith.constant 0 : i32
    %11 = arith.cmpi ne, %10, %c0_i32_9 : i32
    scf.if %11 {
      %c0_10 = arith.constant 0 : index
      %c0_11 = arith.constant 0 : index
      %12 = vector.load %arg8[%c0_10, %c0_11] : memref<16x64xf32, #tpu.memory_space<vmem>>, vector<16x64xf32>
      %c0_12 = arith.constant 0 : index
      %c0_13 = arith.constant 0 : index
      %13 = vector.load %arg5[%c0_12, %c0_13] : memref<1x64xf32, #tpu.memory_space<vmem>>, vector<1x64xf32>
      %14 = vector.broadcast %13 : vector<1x64xf32> to vector<16x64xf32>
      %15 = arith.addf %12, %14 : vector<16x64xf32>
      %c0_14 = arith.constant 0 : index
      %c0_15 = arith.constant 0 : index
      %16 = vector.load %arg6[%c0_14, %c0_15] : memref<16x64xbf16, #tpu.memory_space<vmem>>, vector<16x64xbf16>
      %17 = arith.extf %16 : vector<16x64xbf16> to vector<16x64xf32>
      %18 = arith.addf %15, %17 : vector<16x64xf32>
      %19 = arith.truncf %18 : vector<16x64xf32> to vector<16x64xbf16>
      %c0_16 = arith.constant 0 : index
      %c0_17 = arith.constant 0 : index
      %20 = vector.load %arg7[%c0_16, %c0_17] : memref<16x64xbf16, #tpu.memory_space<vmem>>, vector<16x64xbf16>
      tpu.vector_store %arg7[%c0_16, %c0_17], %19 {strides = array<i32>} : memref<16x64xbf16, #tpu.memory_space<vmem>>, vector<16x64xbf16>,
    } else {
    }
    return
  }
  func.func @transform_0(%arg0: i32, %arg1: i32, %arg2: i32) -> (i32, i32) {
    %c0_i32 = arith.constant 0 : i32
    return %arg0, %arg2 : i32, i32
  }
  func.func @transform_1(%arg0: i32, %arg1: i32, %arg2: i32) -> (i32, i32) {
    %c0_i32 = arith.constant 0 : i32
    return %arg2, %arg1 : i32, i32
  }
  func.func @transform_2(%arg0: i32, %arg1: i32, %arg2: i32) -> (i32, i32) {
    %c0_i32 = arith.constant 0 : i32
    %c0_i32_0 = arith.constant 0 : i32
    return %c0_i32, %arg1 : i32, i32
  }
  func.func @transform_3(%arg0: i32, %arg1: i32, %arg2: i32) -> (i32, i32) {
    %c0_i32 = arith.constant 0 : i32
    return %arg0, %arg1 : i32, i32
  }
  func.func @transform_4(%arg0: i32, %arg1: i32, %arg2: i32) -> (i32, i32) {
    %c0_i32 = arith.constant 0 : i32
    return %arg0, %arg1 : i32, i32
  }
}

module attributes {stable_mosaic.version = 11 : i64} {
  func.func @_matmul_bias_kernel(%arg0: i32, %arg1: i32, %arg2: i32, %arg3: memref<16x64xbf16, #tpu.memory_space<vmem>>, %arg4: memref<64x256xbf16, #tpu.memory_space<vmem>>, %arg5: memref<1x256xf32, #tpu.memory_space<vmem>>, %arg6: memref<16x256xbf16, #tpu.memory_space<vmem>>, %arg7: memref<16x256xf32, #tpu.memory_space<vmem>>) attributes {dimension_semantics = [#tpu.dimension_semantics<parallel>, #tpu.dimension_semantics<parallel>, #tpu.dimension_semantics<arbitrary>], iteration_bounds = array<i64: 1, 1, 1>, scalar_prefetch = 0 : i64, scratch_operands = 1 : i64, tpu.core_type = #tpu.core_type<tc>, window_params = [{transform_indices = @transform_0, window_bounds = array<i64: 16, 64>}, {transform_indices = @transform_1, window_bounds = array<i64: 64, 256>}, {transform_indices = @transform_2, window_bounds = array<i64: 1, 256>}, {transform_indices = @transform_3, window_bounds = array<i64: 16, 256>}]} {
    %c0_i32 = arith.constant 0 : i32
    %0 = arith.cmpi eq, %arg2, %c0_i32 : i32
    %1 = arith.extui %0 : i1 to i32
    %c0_i32_0 = arith.constant 0 : i32
    %2 = arith.cmpi ne, %1, %c0_i32_0 : i32
    scf.if %2 {
      %cst_10 = arith.constant 0.000000e+00 : f32
      %12 = vector.broadcast %cst_10 : f32 to vector<16x256xf32>
      %c0_11 = arith.constant 0 : index
      %c0_12 = arith.constant 0 : index
      %13 = vector.load %arg7[%c0_11, %c0_12] : memref<16x256xf32, #tpu.memory_space<vmem>>, vector<16x256xf32>
      tpu.vector_store %arg7[%c0_11, %c0_12], %12 {strides = array<i32>} : memref<16x256xf32, #tpu.memory_space<vmem>>, vector<16x256xf32>,
    } else {
    }
    %c0 = arith.constant 0 : index
    %c0_1 = arith.constant 0 : index
    %3 = vector.load %arg7[%c0, %c0_1] : memref<16x256xf32, #tpu.memory_space<vmem>>, vector<16x256xf32>
    %c0_2 = arith.constant 0 : index
    %c0_3 = arith.constant 0 : index
    %4 = vector.load %arg3[%c0_2, %c0_3] : memref<16x64xbf16, #tpu.memory_space<vmem>>, vector<16x64xbf16>
    %c0_4 = arith.constant 0 : index
    %c0_5 = arith.constant 0 : index
    %5 = vector.load %arg4[%c0_4, %c0_5] : memref<64x256xbf16, #tpu.memory_space<vmem>>, vector<64x256xbf16>
    %cst = arith.constant dense<0.000000e+00> : vector<16x256xf32>
    %6 = tpu.matmul %4, %5, %cst {dimension_numbers = #tpu.dot_dimension_numbers<[1], [0], [0], [1], [0, 0, 1, 1], [], []>} : vector<16x64xbf16>, vector<64x256xbf16>, vector<16x256xf32> -> vector<16x256xf32>
    %7 = arith.addf %3, %6 : vector<16x256xf32>
    %c0_6 = arith.constant 0 : index
    %c0_7 = arith.constant 0 : index
    %8 = vector.load %arg7[%c0_6, %c0_7] : memref<16x256xf32, #tpu.memory_space<vmem>>, vector<16x256xf32>
    tpu.vector_store %arg7[%c0_6, %c0_7], %7 {strides = array<i32>} : memref<16x256xf32, #tpu.memory_space<vmem>>, vector<16x256xf32>,
    %c0_i32_8 = arith.constant 0 : i32
    %9 = arith.cmpi eq, %arg2, %c0_i32_8 : i32
    %10 = arith.extui %9 : i1 to i32
    %c0_i32_9 = arith.constant 0 : i32
    %11 = arith.cmpi ne, %10, %c0_i32_9 : i32
    scf.if %11 {
      %c0_10 = arith.constant 0 : index
      %c0_11 = arith.constant 0 : index
      %12 = vector.load %arg7[%c0_10, %c0_11] : memref<16x256xf32, #tpu.memory_space<vmem>>, vector<16x256xf32>
      %c0_12 = arith.constant 0 : index
      %c0_13 = arith.constant 0 : index
      %13 = vector.load %arg5[%c0_12, %c0_13] : memref<1x256xf32, #tpu.memory_space<vmem>>, vector<1x256xf32>
      %14 = vector.broadcast %13 : vector<1x256xf32> to vector<16x256xf32>
      %15 = arith.addf %12, %14 : vector<16x256xf32>
      %cst_14 = arith.constant 5.000000e-01 : f32
      %16 = vector.broadcast %cst_14 : f32 to vector<16x256xf32>
      %17 = arith.mulf %16, %15 : vector<16x256xf32>
      %cst_15 = arith.constant 4.471500e-02 : f32
      %18 = vector.broadcast %cst_15 : f32 to vector<16x256xf32>
      %19 = arith.mulf %18, %15 : vector<16x256xf32>
      %20 = arith.mulf %19, %15 : vector<16x256xf32>
      %21 = arith.mulf %20, %15 : vector<16x256xf32>
      %22 = arith.addf %15, %21 : vector<16x256xf32>
      %cst_16 = arith.constant 0.797884583 : f32
      %23 = vector.broadcast %cst_16 : f32 to vector<16x256xf32>
      %24 = arith.mulf %23, %22 : vector<16x256xf32>
      %25 = math.tanh %24 : vector<16x256xf32>
      %cst_17 = arith.constant 1.000000e+00 : f32
      %26 = vector.broadcast %cst_17 : f32 to vector<16x256xf32>
      %27 = arith.addf %26, %25 : vector<16x256xf32>
      %28 = arith.mulf %17, %27 : vector<16x256xf32>
      %29 = arith.truncf %28 : vector<16x256xf32> to vector<16x256xbf16>
      %c0_18 = arith.constant 0 : index
      %c0_19 = arith.constant 0 : index
      %30 = vector.load %arg6[%c0_18, %c0_19] : memref<16x256xbf16, #tpu.memory_space<vmem>>, vector<16x256xbf16>
      tpu.vector_store %arg6[%c0_18, %c0_19], %29 {strides = array<i32>} : memref<16x256xbf16, #tpu.memory_space<vmem>>, vector<16x256xbf16>,
    } else {
    }
    return
  }
  func.func @transform_0(%arg0: i32, %arg1: i32, %arg2: i32) -> (i32, i32) {
    %c0_i32 = arith.constant 0 : i32
    return %arg0, %arg2 : i32, i32
  }
  func.func @transform_1(%arg0: i32, %arg1: i32, %arg2: i32) -> (i32, i32) {
    %c0_i32 = arith.constant 0 : i32
    return %arg2, %arg1 : i32, i32
  }
  func.func @transform_2(%arg0: i32, %arg1: i32, %arg2: i32) -> (i32, i32) {
    %c0_i32 = arith.constant 0 : i32
    %c0_i32_0 = arith.constant 0 : i32
    return %c0_i32, %arg1 : i32, i32
  }
  func.func @transform_3(%arg0: i32, %arg1: i32, %arg2: i32) -> (i32, i32) {
    %c0_i32 = arith.constant 0 : i32
    return %arg0, %arg1 : i32, i32
  }
}

module attributes {stable_mosaic.version = 11 : i64} {
  func.func @_matmul_bias_kernel(%arg0: i32, %arg1: i32, %arg2: i32, %arg3: memref<16x256xbf16, #tpu.memory_space<vmem>>, %arg4: memref<256x64xbf16, #tpu.memory_space<vmem>>, %arg5: memref<1x64xf32, #tpu.memory_space<vmem>>, %arg6: memref<16x64xbf16, #tpu.memory_space<vmem>>, %arg7: memref<16x64xbf16, #tpu.memory_space<vmem>>, %arg8: memref<16x64xf32, #tpu.memory_space<vmem>>) attributes {dimension_semantics = [#tpu.dimension_semantics<parallel>, #tpu.dimension_semantics<parallel>, #tpu.dimension_semantics<arbitrary>], iteration_bounds = array<i64: 1, 1, 1>, scalar_prefetch = 0 : i64, scratch_operands = 1 : i64, tpu.core_type = #tpu.core_type<tc>, window_params = [{transform_indices = @transform_0, window_bounds = array<i64: 16, 256>}, {transform_indices = @transform_1, window_bounds = array<i64: 256, 64>}, {transform_indices = @transform_2, window_bounds = array<i64: 1, 64>}, {transform_indices = @transform_3, window_bounds = array<i64: 16, 64>}, {transform_indices = @transform_4, window_bounds = array<i64: 16, 64>}]} {
    %c0_i32 = arith.constant 0 : i32
    %0 = arith.cmpi eq, %arg2, %c0_i32 : i32
    %1 = arith.extui %0 : i1 to i32
    %c0_i32_0 = arith.constant 0 : i32
    %2 = arith.cmpi ne, %1, %c0_i32_0 : i32
    scf.if %2 {
      %cst_10 = arith.constant 0.000000e+00 : f32
      %12 = vector.broadcast %cst_10 : f32 to vector<16x64xf32>
      %c0_11 = arith.constant 0 : index
      %c0_12 = arith.constant 0 : index
      %13 = vector.load %arg8[%c0_11, %c0_12] : memref<16x64xf32, #tpu.memory_space<vmem>>, vector<16x64xf32>
      tpu.vector_store %arg8[%c0_11, %c0_12], %12 {strides = array<i32>} : memref<16x64xf32, #tpu.memory_space<vmem>>, vector<16x64xf32>,
    } else {
    }
    %c0 = arith.constant 0 : index
    %c0_1 = arith.constant 0 : index
    %3 = vector.load %arg8[%c0, %c0_1] : memref<16x64xf32, #tpu.memory_space<vmem>>, vector<16x64xf32>
    %c0_2 = arith.constant 0 : index
    %c0_3 = arith.constant 0 : index
    %4 = vector.load %arg3[%c0_2, %c0_3] : memref<16x256xbf16, #tpu.memory_space<vmem>>, vector<16x256xbf16>
    %c0_4 = arith.constant 0 : index
    %c0_5 = arith.constant 0 : index
    %5 = vector.load %arg4[%c0_4, %c0_5] : memref<256x64xbf16, #tpu.memory_space<vmem>>, vector<256x64xbf16>
    %cst = arith.constant dense<0.000000e+00> : vector<16x64xf32>
    %6 = tpu.matmul %4, %5, %cst {dimension_numbers = #tpu.dot_dimension_numbers<[1], [0], [0], [1], [0, 0, 1, 1], [], []>} : vector<16x256xbf16>, vector<256x64xbf16>, vector<16x64xf32> -> vector<16x64xf32>
    %7 = arith.addf %3, %6 : vector<16x64xf32>
    %c0_6 = arith.constant 0 : index
    %c0_7 = arith.constant 0 : index
    %8 = vector.load %arg8[%c0_6, %c0_7] : memref<16x64xf32, #tpu.memory_space<vmem>>, vector<16x64xf32>
    tpu.vector_store %arg8[%c0_6, %c0_7], %7 {strides = array<i32>} : memref<16x64xf32, #tpu.memory_space<vmem>>, vector<16x64xf32>,
    %c0_i32_8 = arith.constant 0 : i32
    %9 = arith.cmpi eq, %arg2, %c0_i32_8 : i32
    %10 = arith.extui %9 : i1 to i32
    %c0_i32_9 = arith.constant 0 : i32
    %11 = arith.cmpi ne, %10, %c0_i32_9 : i32
    scf.if %11 {
      %c0_10 = arith.constant 0 : index
      %c0_11 = arith.constant 0 : index
      %12 = vector.load %arg8[%c0_10, %c0_11] : memref<16x64xf32, #tpu.memory_space<vmem>>, vector<16x64xf32>
      %c0_12 = arith.constant 0 : index
      %c0_13 = arith.constant 0 : index
      %13 = vector.load %arg5[%c0_12, %c0_13] : memref<1x64xf32, #tpu.memory_space<vmem>>, vector<1x64xf32>
      %14 = vector.broadcast %13 : vector<1x64xf32> to vector<16x64xf32>
      %15 = arith.addf %12, %14 : vector<16x64xf32>
      %c0_14 = arith.constant 0 : index
      %c0_15 = arith.constant 0 : index
      %16 = vector.load %arg6[%c0_14, %c0_15] : memref<16x64xbf16, #tpu.memory_space<vmem>>, vector<16x64xbf16>
      %17 = arith.extf %16 : vector<16x64xbf16> to vector<16x64xf32>
      %18 = arith.addf %15, %17 : vector<16x64xf32>
      %19 = arith.truncf %18 : vector<16x64xf32> to vector<16x64xbf16>
      %c0_16 = arith.constant 0 : index
      %c0_17 = arith.constant 0 : index
      %20 = vector.load %arg7[%c0_16, %c0_17] : memref<16x64xbf16, #tpu.memory_space<vmem>>, vector<16x64xbf16>
      tpu.vector_store %arg7[%c0_16, %c0_17], %19 {strides = array<i32>} : memref<16x64xbf16, #tpu.memory_space<vmem>>, vector<16x64xbf16>,
    } else {
    }
    return
  }
  func.func @transform_0(%arg0: i32, %arg1: i32, %arg2: i32) -> (i32, i32) {
    %c0_i32 = arith.constant 0 : i32
    return %arg0, %arg2 : i32, i32
  }
  func.func @transform_1(%arg0: i32, %arg1: i32, %arg2: i32) -> (i32, i32) {
    %c0_i32 = arith.constant 0 : i32
    return %arg2, %arg1 : i32, i32
  }
  func.func @transform_2(%arg0: i32, %arg1: i32, %arg2: i32) -> (i32, i32) {
    %c0_i32 = arith.constant 0 : i32
    %c0_i32_0 = arith.constant 0 : i32
    return %c0_i32, %arg1 : i32, i32
  }
  func.func @transform_3(%arg0: i32, %arg1: i32, %arg2: i32) -> (i32, i32) {
    %c0_i32 = arith.constant 0 : i32
    return %arg0, %arg1 : i32, i32
  }
  func.func @transform_4(%arg0: i32, %arg1: i32, %arg2: i32) -> (i32, i32) {
    %c0_i32 = arith.constant 0 : i32
    return %arg0, %arg1 : i32, i32
  }
}

module attributes {stable_mosaic.version = 11 : i64} {
  func.func @_shared_weight_head_kernel(%arg0: i32, %arg1: i32, %arg2: i32, %arg3: memref<1xf32, #tpu.memory_space<smem>>, %arg4: memref<16x64xbf16, #tpu.memory_space<vmem>>, %arg5: memref<256x64xbf16, #tpu.memory_space<vmem>>, %arg6: memref<16x256xf32, #tpu.memory_space<vmem>>, %arg7: memref<16x256xf32, #tpu.memory_space<vmem>>) attributes {dimension_semantics = [#tpu.dimension_semantics<parallel>, #tpu.dimension_semantics<parallel>, #tpu.dimension_semantics<arbitrary>], iteration_bounds = array<i64: 1, 1, 1>, scalar_prefetch = 1 : i64, scratch_operands = 1 : i64, tpu.core_type = #tpu.core_type<tc>, window_params = [{transform_indices = @transform_0, window_bounds = array<i64: 16, 64>}, {transform_indices = @transform_1, window_bounds = array<i64: 256, 64>}, {transform_indices = @transform_2, window_bounds = array<i64: 16, 256>}]} {
    %c0_i32 = arith.constant 0 : i32
    %0 = arith.cmpi eq, %arg2, %c0_i32 : i32
    %1 = arith.extui %0 : i1 to i32
    %c0_i32_0 = arith.constant 0 : i32
    %2 = arith.cmpi ne, %1, %c0_i32_0 : i32
    scf.if %2 {
      %cst_10 = arith.constant 0.000000e+00 : f32
      %12 = vector.broadcast %cst_10 : f32 to vector<16x256xf32>
      %c0_11 = arith.constant 0 : index
      %c0_12 = arith.constant 0 : index
      %13 = vector.load %arg7[%c0_11, %c0_12] : memref<16x256xf32, #tpu.memory_space<vmem>>, vector<16x256xf32>
      tpu.vector_store %arg7[%c0_11, %c0_12], %12 {strides = array<i32>} : memref<16x256xf32, #tpu.memory_space<vmem>>, vector<16x256xf32>,
    } else {
    }
    %c0 = arith.constant 0 : index
    %c0_1 = arith.constant 0 : index
    %3 = vector.load %arg7[%c0, %c0_1] : memref<16x256xf32, #tpu.memory_space<vmem>>, vector<16x256xf32>
    %c0_2 = arith.constant 0 : index
    %c0_3 = arith.constant 0 : index
    %4 = vector.load %arg4[%c0_2, %c0_3] : memref<16x64xbf16, #tpu.memory_space<vmem>>, vector<16x64xbf16>
    %c0_4 = arith.constant 0 : index
    %c0_5 = arith.constant 0 : index
    %5 = vector.load %arg5[%c0_4, %c0_5] : memref<256x64xbf16, #tpu.memory_space<vmem>>, vector<256x64xbf16>
    %cst = arith.constant dense<0.000000e+00> : vector<16x256xf32>
    %6 = tpu.matmul %4, %5, %cst {dimension_numbers = #tpu.dot_dimension_numbers<[1], [1], [0], [0], [0, 0, 1, 0], [], []>} : vector<16x64xbf16>, vector<256x64xbf16>, vector<16x256xf32> -> vector<16x256xf32>
    %7 = arith.addf %3, %6 : vector<16x256xf32>
    %c0_6 = arith.constant 0 : index
    %c0_7 = arith.constant 0 : index
    %8 = vector.load %arg7[%c0_6, %c0_7] : memref<16x256xf32, #tpu.memory_space<vmem>>, vector<16x256xf32>
    tpu.vector_store %arg7[%c0_6, %c0_7], %7 {strides = array<i32>} : memref<16x256xf32, #tpu.memory_space<vmem>>, vector<16x256xf32>,
    %c0_i32_8 = arith.constant 0 : i32
    %9 = arith.cmpi eq, %arg2, %c0_i32_8 : i32
    %10 = arith.extui %9 : i1 to i32
    %c0_i32_9 = arith.constant 0 : i32
    %11 = arith.cmpi ne, %10, %c0_i32_9 : i32
    scf.if %11 {
      %c0_10 = arith.constant 0 : index
      %c0_11 = arith.constant 0 : index
      %12 = vector.load %arg7[%c0_10, %c0_11] : memref<16x256xf32, #tpu.memory_space<vmem>>, vector<16x256xf32>
      %c0_12 = arith.constant 0 : index
      %13 = memref.load %arg3[%c0_12] : memref<1xf32, #tpu.memory_space<smem>>
      %14 = vector.broadcast %13 : f32 to vector<16x256xf32>
      %15 = arith.mulf %12, %14 : vector<16x256xf32>
      %c0_13 = arith.constant 0 : index
      %c0_14 = arith.constant 0 : index
      %16 = vector.load %arg6[%c0_13, %c0_14] : memref<16x256xf32, #tpu.memory_space<vmem>>, vector<16x256xf32>
      tpu.vector_store %arg6[%c0_13, %c0_14], %15 {strides = array<i32>} : memref<16x256xf32, #tpu.memory_space<vmem>>, vector<16x256xf32>,
    } else {
    }
    return
  }
  func.func @transform_0(%arg0: i32, %arg1: i32, %arg2: i32, %arg3: memref<1xf32, #tpu.memory_space<smem>>) -> (i32, i32) {
    %c0_i32 = arith.constant 0 : i32
    return %arg0, %arg2 : i32, i32
  }
  func.func @transform_1(%arg0: i32, %arg1: i32, %arg2: i32, %arg3: memref<1xf32, #tpu.memory_space<smem>>) -> (i32, i32) {
    %c0_i32 = arith.constant 0 : i32
    return %arg1, %arg2 : i32, i32
  }
  func.func @transform_2(%arg0: i32, %arg1: i32, %arg2: i32, %arg3: memref<1xf32, #tpu.memory_space<smem>>) -> (i32, i32) {
    %c0_i32 = arith.constant 0 : i32
    return %arg0, %arg1 : i32, i32
  }
}

</mosaic_0001>

<llo_original>
// kernel: hybrid_wann_gpt_forward.16
$region0: #{hybrid_wann_gpt_forward.16}
  #allocation0 [shape = 'u32[]', space=smem, size = 0x4, offset = 0x4, fixed_abs, tag = 'smem constant byte address 0x4 - core index']
  #allocation1 [shape = 'u32[144,128]{1,0:T(1,128)}', space=vmem, size = 0x12000, scoped, tag = 'internal scratch']
  %s0 = inlined_call_operand.vmem [shape: bf16[16,64], index: 0, kind: input, shape index: {}]
  %s1 = inlined_call_operand.vmem [shape: f32[1,64], index: 1, kind: input, shape index: {}]
  %s2 = inlined_call_operand.vmem [shape: f32[1,64], index: 2, kind: input, shape index: {}]
  %s3 = inlined_call_operand.vmem [shape: bf16[16,64], index: 3, kind: output, shape index: {}]
  %s4 = sld [smem:[#allocation0]]
  $region22: #{hybrid_wann_gpt_forward.16} parent=0
    _
  %s6 = ssub.s32 1, %s4
  %s7 = scalar_select 0, %s6, %s4
  // Predicated region
  $region2: #{hybrid_wann_gpt_forward.16} parent=0 // pred_check
    _
  $region3: #{hybrid_wann_gpt_forward.16} parent=0 // pred_check_branch
    %9 = sbr.rel (0) target = $region5
  $region4: #{hybrid_wann_gpt_forward.16} parent=0 // pred_region
    _
  $region5: #{hybrid_wann_gpt_forward.16} parent=0 // pred_fallthru
    _
  // Predicated region
  $region6: #{hybrid_wann_gpt_forward.16} parent=0 // pred_check
    _
  $region7: #{hybrid_wann_gpt_forward.16} parent=0 // pred_check_branch
    %11 = sbr.rel (0) target = $region9
  $region8: #{hybrid_wann_gpt_forward.16} parent=0 // pred_region
    _
  $region9: #{hybrid_wann_gpt_forward.16} parent=0 // pred_fallthru
    _
  // Predicated region
  $region10: #{hybrid_wann_gpt_forward.16} parent=0 // pred_check
    _
  $region11: #{hybrid_wann_gpt_forward.16} parent=0 // pred_check_branch
    %13 = sbr.rel (0) target = $region13
  $region12: #{hybrid_wann_gpt_forward.16} parent=0 // pred_region
    _
  $region13: #{hybrid_wann_gpt_forward.16} parent=0 // pred_fallthru
    _
  %v14 = vld [vmem:[%s0] sm:$0xf]
  %v15 = vld [vmem:[%s0 + $0x4] sm:$0xf]
  %v16 = vunpack.c.l.bf16 %v14
  %v17 = vunpack.c.l.bf16 %v15
  %vm18 = vcmask 523264
  %v19 = vsel %vm18, %v16, 0.0
  %20 = vadd.xlane.f32.xlu0 %v19
  %v21 = vpop.xlane.xlu0 %20
  %v22 = vsel %vm18, %v17, 0.0
  %23 = vadd.xlane.f32.xlu0 %v22
  %v24 = vpop.xlane.xlu0 %23
  %v25 = vrcp.pop 64.0
  %v26 = vmul.f32 %v21, %v25
  %v27 = vmul.f32 %v24, %v25
  %v28 = vsub.f32 %v16, %v26
  %v29 = vsub.f32 %v17, %v27
  %v30 = vmul.f32 %v28, %v28
  %v31 = vmul.f32 %v29, %v29
  %v32 = vsel %vm18, %v30, 0.0
  %33 = vadd.xlane.f32.xlu0 %v32
  %v34 = vpop.xlane.xlu0 %33
  %v35 = vsel %vm18, %v31, 0.0
  %36 = vadd.xlane.f32.xlu0 %v35
  %v37 = vpop.xlane.xlu0 %36
  %v38 = vmul.f32 %v34, %v25
  %v39 = vmul.f32 %v37, %v25
  %v40 = vadd.f32 %v38, 1e-05
  %v41 = vadd.f32 %v39, 1e-05
  %v42 = vrsqrt.pop %v40
  %v43 = vrsqrt.pop %v41
  %v44 = vmul.f32 %v28, %v42
  %v45 = vmul.f32 %v29, %v43
  %v46 = vld [vmem:[%s1] sm:$0x1]
  %v48 = vlaneseq
  %v49 = vshrl.u32 %v48, 7
  %v50 = vsub.s32 0, %v49
  %v51 = vrot.slane %v46, %v50
  %v53 = vmul.f32 %v44, %v51
  %v54 = vmul.f32 %v45, %v51
  %v55 = vld [vmem:[%s2] sm:$0x1]
  %v57 = vlaneseq
  %v58 = vshrl.u32 %v57, 7
  %v59 = vsub.s32 0, %v58
  %v60 = vrot.slane %v55, %v59
  %v62 = vadd.f32 %v53, %v60
  %v63 = vadd.f32 %v54, %v60
  %v64 = vpack.c.bf16 %v63, %v62
  %v66 = vunpack.c.l.b16 %v64
  %v67 = vunpack.c.h.b16 %v64
  %v68 = vpack.c.b16 %v66, %v66
  %v69 = vpack.c.b16 %v67, %v67
  %vm72 = vcmask 519168
  %73 = vst.msk [vmem:[%s3] sm:$0xf] %vm72, %v68
  %74 = vst.msk [vmem:[%s3 + $0x4] sm:$0xf] %vm72, %v69
  // Predicated region
  $region14: #{hybrid_wann_gpt_forward.16} parent=0 // pred_check
    _
  $region15: #{hybrid_wann_gpt_forward.16} parent=0 // pred_check_branch
    %76 = sbr.rel (0) target = $region17
  $region16: #{hybrid_wann_gpt_forward.16} parent=0 // pred_region
    _
  $region17: #{hybrid_wann_gpt_forward.16} parent=0 // pred_fallthru
    _
  // Predicated region
  $region18: #{hybrid_wann_gpt_forward.16} parent=0 // pred_check
    _
  $region19: #{hybrid_wann_gpt_forward.16} parent=0 // pred_check_branch
    %78 = sbr.rel (0) target = $region21
  $region20: #{hybrid_wann_gpt_forward.16} parent=0 // pred_region
    _
  $region21: #{hybrid_wann_gpt_forward.16} parent=0 // pred_fallthru
    _

// kernel: hybrid_wann_gpt_forward.17
$region0: #{hybrid_wann_gpt_forward.17}
  #allocation0 [shape = 'u32[]', space=smem, size = 0x4, offset = 0x4, fixed_abs, tag = 'smem constant byte address 0x4 - core index']
  #allocation1 [shape = 'u32[144,128]{1,0:T(1,128)}', space=vmem, size = 0x12000, scoped, tag = 'internal scratch']
  #allocation2 [shape = 'f32[16,192]{1,0:T(8,128)}', space=vmem, size = 0x4000, scoped, tag = 'scratch operand']
  %s0 = inlined_call_operand.vmem [shape: bf16[16,64], index: 0, kind: input, shape index: {}]
  %s1 = inlined_call_operand.vmem [shape: bf16[64,192], index: 1, kind: input, shape index: {}]
  %s2 = inlined_call_operand.vmem [shape: f32[1,192], index: 2, kind: input, shape index: {}]
  %s3 = inlined_call_operand.vmem [shape: bf16[16,192], index: 3, kind: output, shape index: {}]
  %s4 = sld [smem:[#allocation0]]
  $region30: #{hybrid_wann_gpt_forward.17} parent=0
    _
  %s6 = ssub.s32 1, %s4
  %s7 = scalar_select 0, %s6, %s4
  // Predicated region
  $region2: #{hybrid_wann_gpt_forward.17} parent=0 // pred_check
    _
  $region3: #{hybrid_wann_gpt_forward.17} parent=0 // pred_check_branch
    %9 = sbr.rel (0) target = $region5
  $region4: #{hybrid_wann_gpt_forward.17} parent=0 // pred_region
    _
  $region5: #{hybrid_wann_gpt_forward.17} parent=0 // pred_fallthru
    _
  // Predicated region
  $region6: #{hybrid_wann_gpt_forward.17} parent=0 // pred_check
    _
  $region7: #{hybrid_wann_gpt_forward.17} parent=0 // pred_check_branch
    %11 = sbr.rel (0) target = $region9
  $region8: #{hybrid_wann_gpt_forward.17} parent=0 // pred_region
    _
  $region9: #{hybrid_wann_gpt_forward.17} parent=0 // pred_fallthru
    _
  // Predicated region
  $region10: #{hybrid_wann_gpt_forward.17} parent=0 // pred_check
    _
  $region11: #{hybrid_wann_gpt_forward.17} parent=0 // pred_check_branch
    %13 = sbr.rel (0) target = $region13
  $region12: #{hybrid_wann_gpt_forward.17} parent=0 // pred_region
    _
  $region13: #{hybrid_wann_gpt_forward.17} parent=0 // pred_fallthru
    _
  %p15 = scmp.eq.s32.totalorder 0, 0
  // Predicated region
  $region14: #{hybrid_wann_gpt_forward.17} parent=0 // pred_check
    %p16 = pneg %p15
  $region15: #{hybrid_wann_gpt_forward.17} parent=0 // pred_check_branch
    %18 = sbr.rel (%p16) target = $region17
  $region16: #{hybrid_wann_gpt_forward.17} parent=0 // pred_region
    %19 = vst [vmem:[#allocation2] sm:$0xff] 0.0
    %vm20 = vcmask 523264
    %21 = vst.msk [vmem:[#allocation2 + $0x8] sm:$0xff] %vm20, 0.0
    %22 = vst [vmem:[#allocation2 + $0x10] sm:$0xff] 0.0
    %23 = vst.msk [vmem:[#allocation2 + $0x18] sm:$0xff] %vm20, 0.0
  $region17: #{hybrid_wann_gpt_forward.17} parent=0 // pred_fallthru
    _
  %v24 = vld [vmem:[#allocation2] sm:$0xff]
  %v25 = vld [vmem:[#allocation2 + $0x8] sm:$0xff]
  %v26 = vld [vmem:[#allocation2 + $0x10] sm:$0xff]
  %v27 = vld [vmem:[#allocation2 + $0x18] sm:$0xff]
  %v28 = vld [vmem:[%s0] sm:$0xf]
  %v29 = vld [vmem:[%s0 + $0x4] sm:$0xf]
  %v30 = vld [vmem:[%s1] sm:$0xff]
  %v31 = vld [vmem:[%s1 + $0x8] sm:$0xff]
  %v32 = vld [vmem:[%s1 + $0x10] sm:$0xff]
  %v33 = vld [vmem:[%s1 + $0x18] sm:$0xff]
  %v34 = vld [vmem:[%s1 + $0x20] sm:$0xff]
  %v35 = vld [vmem:[%s1 + $0x28] sm:$0xff]
  %v36 = vld [vmem:[%s1 + $0x30] sm:$0xff]
  %v37 = vld [vmem:[%s1 + $0x38] sm:$0xff]
  %v40 = vunpack.c.l.b16 %v28
  %v41 = vunpack.c.l.b16 %v29
  %v42 = vpack.c.b16 %v41, %v40
  %v51 = vunpack.c.l.b16 %v30
  %v52 = vunpack.c.h.b16 %v30
  %v53 = vunpack.c.l.b16 %v31
  %v54 = vunpack.c.h.b16 %v31
  %v55 = vunpack.c.l.b16 %v32
  %v56 = vunpack.c.h.b16 %v32
  %v57 = vunpack.c.l.b16 %v33
  %v58 = vunpack.c.h.b16 %v33
  %v59 = vunpack.c.l.b16 %v34
  %v60 = vunpack.c.h.b16 %v34
  %v61 = vunpack.c.l.b16 %v35
  %v62 = vunpack.c.h.b16 %v35
  %v63 = vunpack.c.l.b16 %v36
  %v64 = vunpack.c.h.b16 %v36
  %v65 = vunpack.c.l.b16 %v37
  %v66 = vunpack.c.h.b16 %v37
  %v67 = vpack.c.b16 %v53, %v51
  %v68 = vpack.c.b16 %v54, %v52
  %v69 = vpack.c.b16 %v57, %v55
  %v70 = vpack.c.b16 %v58, %v56
  %v71 = vpack.c.b16 %v61, %v59
  %v72 = vpack.c.b16 %v62, %v60
  %v73 = vpack.c.b16 %v65, %v63
  %v74 = vpack.c.b16 %v66, %v64
  %vm83 = vcmask 523264
  %v85 = vsel %vm83, %v42, 0
  %87 = vmatprep.subr.bf16.mxu0 %v68
  %88 = vmatpush1.bf16.msra.mxu0 %v67
  %89 = vmatprep.subr.bf16.mxu0 %v70
  %90 = vmatpush1.bf16.msra.mxu0 %v69
  %91 = vmatprep.subr.bf16.mxu0 %v72
  %92 = vmatpush1.bf16.msra.mxu0 %v71
  %93 = vmatprep.subr.bf16.mxu0 %v74
  %94 = vmatpush1.bf16.msra.mxu0 %v73
  %95 = vmatprep.subr.bf16.mxu0 0
  %96 = vmatpush1.bf16.msra.mxu0 0
  %97 = vmatprep.subr.bf16.mxu0 0
  %98 = vmatpush1.bf16.msra.mxu0 0
  %99 = vmatprep.subr.bf16.mxu0 0
  %100 = vmatpush1.bf16.msra.mxu0 0
  %101 = vmatprep.subr.bf16.mxu0 0
  %102 = vmatpush1.bf16.msra.mxu0 0
  %103 = vmatprep.subr.bf16.mxu0 0
  %104 = vmatpush1.bf16.msra.mxu0 0
  %105 = vmatprep.subr.bf16.mxu0 0
  %106 = vmatpush1.bf16.msra.mxu0 0
  %107 = vmatprep.subr.bf16.mxu0 0
  %108 = vmatpush1.bf16.msra.mxu0 0
  %109 = vmatprep.subr.bf16.mxu0 0
  %110 = vmatpush1.bf16.msra.mxu0 0
  %111 = vmatprep.subr.bf16.mxu0 0
  %112 = vmatpush1.bf16.msra.mxu0 0
  %113 = vmatprep.subr.bf16.mxu0 0
  %114 = vmatpush1.bf16.msra.mxu0 0
  %115 = vmatprep.subr.bf16.mxu0 0
  %116 = vmatpush1.bf16.msra.mxu0 0
  %117 = vmatprep.subr.bf16.mxu0 0
  %118 = vmatpush1.bf16.msra.mxu0 0
  %119 = vmatprep.mubr.bf16.mxu0 0
  %120 = vmatmul.mubr.bf16.gmra.mrb[0].mxu0 %v85
  %v121 = vpop.f32.mrb[0].mxu0
  %v122 = vadd.f32 0.0, %v121
  %v123 = vpop.f32.mrb[0].mxu0
  %v124 = vadd.f32 0.0, %v123
  %v125 = vpop.f32.mrb[0].mxu0
  %v126 = vadd.f32 0.0, %v125
  %v127 = vpop.f32.mrb[0].mxu0
  %v128 = vadd.f32 0.0, %v127
  %129 = vdwg.mxu0
  %v130 = vadd.f32 %v24, %v122
  %v131 = vadd.f32 %v25, %v124
  %v132 = vadd.f32 %v26, %v126
  %v133 = vadd.f32 %v27, %v128
  %134 = vst [vmem:[#allocation2] sm:$0xff] %v130
  %135 = vst.msk [vmem:[#allocation2 + $0x8] sm:$0xff] %vm83, %v131
  %136 = vst [vmem:[#allocation2 + $0x10] sm:$0xff] %v132
  %137 = vst.msk [vmem:[#allocation2 + $0x18] sm:$0xff] %vm83, %v133
  // Predicated region
  $region18: #{hybrid_wann_gpt_forward.17} parent=0 // pred_check
    %p138 = pneg %p15
  $region19: #{hybrid_wann_gpt_forward.17} parent=0 // pred_check_branch
    %140 = sbr.rel (%p138) target = $region21
  $region20: #{hybrid_wann_gpt_forward.17} parent=0 // pred_region
    %v141 = vld [vmem:[#allocation2] sm:$0xff]
    %v142 = vld [vmem:[#allocation2 + $0x8] sm:$0xff]
    %v143 = vld [vmem:[#allocation2 + $0x10] sm:$0xff]
    %v144 = vld [vmem:[#allocation2 + $0x18] sm:$0xff]
    %v145 = vld [vmem:[%s2] sm:$0x3]
    %v147 = vlaneseq
    %v148 = vshrl.u32 %v147, 7
    %v149 = vsub.s32 0, %v148
    %v150 = vrot.slane %v145, %v149
    %v151 = vlaneseq
    %v152 = vshrl.u32 %v151, 7
    %v153 = vsub.s32 1, %v152
    %v154 = vrot.slane %v145, %v153
    %v157 = vadd.f32 %v141, %v150
    %v158 = vadd.f32 %v142, %v154
    %v159 = vadd.f32 %v143, %v150
    %v160 = vadd.f32 %v144, %v154
    %v161 = vpack.c.bf16 %v159, %v157
    %v162 = vpack.c.bf16 %v160, %v158
    %v165 = vunpack.c.l.b16 %v161
    %v166 = vunpack.c.l.b16 %v162
    %v167 = vunpack.c.h.b16 %v161
    %v168 = vunpack.c.h.b16 %v162
    %v169 = vpack.c.b16 %v166, %v165
    %v170 = vpack.c.b16 %v168, %v167
    %vm173 = vcmask 1043456
    %vm174 = vcmask 523268
    %vm175 = vmor %vm174, %vm173
    %176 = vst.msk [vmem:[%s3] sm:$0xff] %vm175, %v169
    %177 = vst.msk [vmem:[%s3 + $0x8] sm:$0xff] %vm175, %v170
  $region21: #{hybrid_wann_gpt_forward.17} parent=0 // pred_fallthru
    _
  // Predicated region
  $region22: #{hybrid_wann_gpt_forward.17} parent=0 // pred_check
    _
  $region23: #{hybrid_wann_gpt_forward.17} parent=0 // pred_check_branch
    %179 = sbr.rel (0) target = $region25
  $region24: #{hybrid_wann_gpt_forward.17} parent=0 // pred_region
    _
  $region25: #{hybrid_wann_gpt_forward.17} parent=0 // pred_fallthru
    _
  // Predicated region
  $region26: #{hybrid_wann_gpt_forward.17} parent=0 // pred_check
    _
  $region27: #{hybrid_wann_gpt_forward.17} parent=0 // pred_check_branch
    %181 = sbr.rel (0) target = $region29
  $region28: #{hybrid_wann_gpt_forward.17} parent=0 // pred_region
    _
  $region29: #{hybrid_wann_gpt_forward.17} parent=0 // pred_fallthru
    _

// kernel: hybrid_wann_gpt_forward.19
$region0: #{hybrid_wann_gpt_forward.19}
  #allocation0 [shape = 'u32[]', space=smem, size = 0x4, offset = 0x4, fixed_abs, tag = 'smem constant byte address 0x4 - core index']
  #allocation1 [shape = 'u32[144,128]{1,0:T(1,128)}', space=vmem, size = 0x12000, scoped, tag = 'internal scratch']
  #allocation2 [shape = 'f32[16,64]{1,0:T(8,128)}', space=vmem, size = 0x2000, scoped, tag = 'scratch operand']
  %s0 = inlined_call_operand.vmem [shape: bf16[16,64], index: 0, kind: input, shape index: {}]
  %s1 = inlined_call_operand.vmem [shape: bf16[64,64], index: 1, kind: input, shape index: {}]
  %s2 = inlined_call_operand.vmem [shape: f32[1,64], index: 2, kind: input, shape index: {}]
  %s3 = inlined_call_operand.vmem [shape: bf16[16,64], index: 3, kind: input, shape index: {}]
  %s4 = inlined_call_operand.vmem [shape: bf16[16,64], index: 4, kind: output, shape index: {}]
  %s5 = sld [smem:[#allocation0]]
  $region34: #{hybrid_wann_gpt_forward.19} parent=0
    _
  %s7 = ssub.s32 1, %s5
  %s8 = scalar_select 0, %s7, %s5
  // Predicated region
  $region2: #{hybrid_wann_gpt_forward.19} parent=0 // pred_check
    _
  $region3: #{hybrid_wann_gpt_forward.19} parent=0 // pred_check_branch
    %10 = sbr.rel (0) target = $region5
  $region4: #{hybrid_wann_gpt_forward.19} parent=0 // pred_region
    _
  $region5: #{hybrid_wann_gpt_forward.19} parent=0 // pred_fallthru
    _
  // Predicated region
  $region6: #{hybrid_wann_gpt_forward.19} parent=0 // pred_check
    _
  $region7: #{hybrid_wann_gpt_forward.19} parent=0 // pred_check_branch
    %12 = sbr.rel (0) target = $region9
  $region8: #{hybrid_wann_gpt_forward.19} parent=0 // pred_region
    _
  $region9: #{hybrid_wann_gpt_forward.19} parent=0 // pred_fallthru
    _
  // Predicated region
  $region10: #{hybrid_wann_gpt_forward.19} parent=0 // pred_check
    _
  $region11: #{hybrid_wann_gpt_forward.19} parent=0 // pred_check_branch
    %14 = sbr.rel (0) target = $region13
  $region12: #{hybrid_wann_gpt_forward.19} parent=0 // pred_region
    _
  $region13: #{hybrid_wann_gpt_forward.19} parent=0 // pred_fallthru
    _
  // Predicated region
  $region14: #{hybrid_wann_gpt_forward.19} parent=0 // pred_check
    _
  $region15: #{hybrid_wann_gpt_forward.19} parent=0 // pred_check_branch
    %16 = sbr.rel (0) target = $region17
  $region16: #{hybrid_wann_gpt_forward.19} parent=0 // pred_region
    _
  $region17: #{hybrid_wann_gpt_forward.19} parent=0 // pred_fallthru
    _
  %p18 = scmp.eq.s32.totalorder 0, 0
  // Predicated region
  $region18: #{hybrid_wann_gpt_forward.19} parent=0 // pred_check
    %p19 = pneg %p18
  $region19: #{hybrid_wann_gpt_forward.19} parent=0 // pred_check_branch
    %21 = sbr.rel (%p19) target = $region21
  $region20: #{hybrid_wann_gpt_forward.19} parent=0 // pred_region
    %vm22 = vcmask 523264
    %23 = vst.msk [vmem:[#allocation2] sm:$0xff] %vm22, 0.0
    %24 = vst.msk [vmem:[#allocation2 + $0x8] sm:$0xff] %vm22, 0.0
  $region21: #{hybrid_wann_gpt_forward.19} parent=0 // pred_fallthru
    _
  %v25 = vld [vmem:[#allocation2] sm:$0xff]
  %v26 = vld [vmem:[#allocation2 + $0x8] sm:$0xff]
  %v27 = vld [vmem:[%s0] sm:$0xf]
  %v28 = vld [vmem:[%s0 + $0x4] sm:$0xf]
  %v29 = vld [vmem:[%s1] sm:$0xf]
  %v30 = vld [vmem:[%s1 + $0x4] sm:$0xf]
  %v31 = vld [vmem:[%s1 + $0x8] sm:$0xf]
  %v32 = vld [vmem:[%s1 + $0xc] sm:$0xf]
  %v33 = vld [vmem:[%s1 + $0x10] sm:$0xf]
  %v34 = vld [vmem:[%s1 + $0x14] sm:$0xf]
  %v35 = vld [vmem:[%s1 + $0x18] sm:$0xf]
  %v36 = vld [vmem:[%s1 + $0x1c] sm:$0xf]
  %v39 = vunpack.c.l.b16 %v27
  %v40 = vunpack.c.l.b16 %v28
  %v41 = vpack.c.b16 %v40, %v39
  %v50 = vunpack.c.l.b16 %v29
  %v51 = vunpack.c.l.b16 %v30
  %v52 = vunpack.c.l.b16 %v31
  %v53 = vunpack.c.l.b16 %v32
  %v54 = vunpack.c.l.b16 %v33
  %v55 = vunpack.c.l.b16 %v34
  %v56 = vunpack.c.l.b16 %v35
  %v57 = vunpack.c.l.b16 %v36
  %v58 = vpack.c.b16 %v51, %v50
  %v59 = vpack.c.b16 %v53, %v52
  %v60 = vpack.c.b16 %v55, %v54
  %v61 = vpack.c.b16 %v57, %v56
  %vm66 = vcmask 523264
  %v68 = vsel %vm66, %v41, 0
  %70 = vmatprep.subr.bf16.mxu0 0
  %71 = vmatpush1.bf16.msra.mxu0 %v58
  %72 = vmatprep.subr.bf16.mxu0 0
  %73 = vmatpush1.bf16.msra.mxu0 %v59
  %74 = vmatprep.subr.bf16.mxu0 0
  %75 = vmatpush1.bf16.msra.mxu0 %v60
  %76 = vmatprep.subr.bf16.mxu0 0
  %77 = vmatpush1.bf16.msra.mxu0 %v61
  %78 = vmatprep.subr.bf16.mxu0 0
  %79 = vmatpush1.bf16.msra.mxu0 0
  %80 = vmatprep.subr.bf16.mxu0 0
  %81 = vmatpush1.bf16.msra.mxu0 0
  %82 = vmatprep.subr.bf16.mxu0 0
  %83 = vmatpush1.bf16.msra.mxu0 0
  %84 = vmatprep.subr.bf16.mxu0 0
  %85 = vmatpush1.bf16.msra.mxu0 0
  %86 = vmatprep.subr.bf16.mxu0 0
  %87 = vmatpush1.bf16.msra.mxu0 0
  %88 = vmatprep.subr.bf16.mxu0 0
  %89 = vmatpush1.bf16.msra.mxu0 0
  %90 = vmatprep.subr.bf16.mxu0 0
  %91 = vmatpush1.bf16.msra.mxu0 0
  %92 = vmatprep.subr.bf16.mxu0 0
  %93 = vmatpush1.bf16.msra.mxu0 0
  %94 = vmatprep.subr.bf16.mxu0 0
  %95 = vmatpush1.bf16.msra.mxu0 0
  %96 = vmatprep.subr.bf16.mxu0 0
  %97 = vmatpush1.bf16.msra.mxu0 0
  %98 = vmatprep.subr.bf16.mxu0 0
  %99 = vmatpush1.bf16.msra.mxu0 0
  %100 = vmatprep.subr.bf16.mxu0 0
  %101 = vmatpush1.bf16.msra.mxu0 0
  %102 = vmatprep.mubr.bf16.mxu0 0
  %103 = vmatmul.mubr.bf16.gmra.mrb[0].mxu0 %v68
  %v104 = vpop.f32.mrb[0].mxu0
  %v105 = vadd.f32 0.0, %v104
  %v106 = vpop.f32.mrb[0].mxu0
  %v107 = vpop.f32.mrb[0].mxu0
  %v108 = vadd.f32 0.0, %v107
  %v109 = vpop.f32.mrb[0].mxu0
  %110 = vdwg.mxu0
  %v111 = vadd.f32 %v25, %v105
  %v112 = vadd.f32 %v26, %v108
  %113 = vst.msk [vmem:[#allocation2] sm:$0xff] %vm66, %v111
  %114 = vst.msk [vmem:[#allocation2 + $0x8] sm:$0xff] %vm66, %v112
  // Predicated region
  $region22: #{hybrid_wann_gpt_forward.19} parent=0 // pred_check
    %p115 = pneg %p18
  $region23: #{hybrid_wann_gpt_forward.19} parent=0 // pred_check_branch
    %117 = sbr.rel (%p115) target = $region25
  $region24: #{hybrid_wann_gpt_forward.19} parent=0 // pred_region
    %v118 = vld [vmem:[#allocation2] sm:$0xff]
    %v119 = vld [vmem:[#allocation2 + $0x8] sm:$0xff]
    %v120 = vld [vmem:[%s2] sm:$0x1]
    %v122 = vlaneseq
    %v123 = vshrl.u32 %v122, 7
    %v124 = vsub.s32 0, %v123
    %v125 = vrot.slane %v120, %v124
    %v127 = vadd.f32 %v118, %v125
    %v128 = vadd.f32 %v119, %v125
    %v129 = vld [vmem:[%s3] sm:$0xf]
    %v130 = vld [vmem:[%s3 + $0x4] sm:$0xf]
    %v131 = vunpack.c.l.bf16 %v129
    %v132 = vunpack.c.l.bf16 %v130
    %v133 = vadd.f32 %v127, %v131
    %v134 = vadd.f32 %v128, %v132
    %v135 = vpack.c.bf16 %v134, %v133
    %v137 = vunpack.c.l.b16 %v135
    %v138 = vunpack.c.h.b16 %v135
    %v139 = vpack.c.b16 %v137, %v137
    %v140 = vpack.c.b16 %v138, %v138
    %vm143 = vcmask 519168
    %144 = vst.msk [vmem:[%s4] sm:$0xf] %vm143, %v139
    %145 = vst.msk [vmem:[%s4 + $0x4] sm:$0xf] %vm143, %v140
  $region25: #{hybrid_wann_gpt_forward.19} parent=0 // pred_fallthru
    _
  // Predicated region
  $region26: #{hybrid_wann_gpt_forward.19} parent=0 // pred_check
    _
  $region27: #{hybrid_wann_gpt_forward.19} parent=0 // pred_check_branch
    %147 = sbr.rel (0) target = $region29
  $region28: #{hybrid_wann_gpt_forward.19} parent=0 // pred_region
    _
  $region29: #{hybrid_wann_gpt_forward.19} parent=0 // pred_fallthru
    _
  // Predicated region
  $region30: #{hybrid_wann_gpt_forward.19} parent=0 // pred_check
    _
  $region31: #{hybrid_wann_gpt_forward.19} parent=0 // pred_check_branch
    %149 = sbr.rel (0) target = $region33
  $region32: #{hybrid_wann_gpt_forward.19} parent=0 // pred_region
    _
  $region33: #{hybrid_wann_gpt_forward.19} parent=0 // pred_fallthru
    _

// kernel: hybrid_wann_gpt_forward.18
$region0: #{hybrid_wann_gpt_forward.18}
  #allocation0 [shape = 'u32[]', space=smem, size = 0x4, offset = 0x4, fixed_abs, tag = 'smem constant byte address 0x4 - core index']
  #allocation1 [shape = 'u32[144,128]{1,0:T(1,128)}', space=vmem, size = 0x12000, scoped, tag = 'internal scratch']
  %s0 = inlined_call_operand.vmem [shape: f32[2,1,8], index: 0, kind: input, shape index: {}]
  %s1 = inlined_call_operand.vmem [shape: bf16[2,8,192], index: 1, kind: input, shape index: {}]
  %s2 = inlined_call_operand.vmem [shape: bf16[2,8,64], index: 2, kind: output, shape index: {}]
  %s3 = sld [smem:[#allocation0]]
  $region41: #{hybrid_wann_gpt_forward.18} parent=0
    _
  %s5 = ssub.s32 1, %s3
  %s6 = scalar_select 0, %s5, %s3
  loop: start=0, step=1, limit=4
  $region2: #{hybrid_wann_gpt_forward.18} parent=0 // loop_pre_header
    _
  $region3: #{hybrid_wann_gpt_forward.18} parent=0 // loop_header
    %s8 = sphi 0, %s12
    %p9 = scmp.ge.s32.totalorder %s8, 4
    %s18 = sphi 0, %s20
    %s21 = sphi 0, %s18
    %s22 = sphi 0, %s21
    %s38 = sphi 0, %s22
    %s44 = sphi 0, %s46
    %s47 = sphi 0, %s44
    %s48 = sphi 0, %s47
    %s64 = sphi 0, %s48
    %s70 = sphi 0, %s72
    %s73 = sphi 0, %s70
    %s74 = sphi 0, %s73
    %s90 = sphi 0, %s74
  $region4: #{hybrid_wann_gpt_forward.18} parent=0 // loop_header_branch
    %11 = sbr.rel (%p9) target = $region8
  $region5: #{hybrid_wann_gpt_forward.18} parent=0 // loop_body
    %s13 = ssub.s32 %s8, 1
    %s14 = ssub.s32 %s8, 2
    %s15 = sadd.s32 %s8, 1
    %s16 = ssub.s32 %s8, %s15
    %p17 = scmp.eq.s32.totalorder %s16, 0
    %s19 = sadd.s32 %s18, 1
    %s20 = scalar_select %p17, %s18, %s19
    %p23 = pneg %p17
    %p24 = scmp.eq.s32.totalorder %s8, 1
    %p25 = por %p23, %p24
    %p26 = scmp.ne.s32.totalorder %s18, %s21
    %p27 = scmp.eq.s32.totalorder %s8, 0
    %p28 = por %p26, %p27
    %p29 = scmp.ne.s32.totalorder %s18, %s21
    %p30 = scmp.eq.s32.totalorder %s13, 1
    %p31 = por %p29, %p30
    %p32 = scmp.ne.s32.totalorder %s21, %s22
    %p33 = scmp.eq.s32.totalorder %s13, 0
    %p34 = por %p32, %p33
    %p35 = scmp.ne.s32.totalorder %s21, %s22
    %p36 = scmp.eq.s32.totalorder %s14, 1
    %p37 = por %p35, %p36
    %p39 = scmp.ne.s32.totalorder %s22, %s38
    %p40 = scmp.eq.s32.totalorder %s14, 0
    %p41 = por %p39, %p40
    %s42 = ssub.s32 %s8, %s15
    %p43 = scmp.eq.s32.totalorder %s42, 0
    %s45 = sadd.s32 %s44, 1
    %s46 = scalar_select %p43, %s44, %s45
    %p49 = pneg %p43
    %p50 = scmp.eq.s32.totalorder %s8, 1
    %p51 = por %p49, %p50
    %p52 = scmp.ne.s32.totalorder %s44, %s47
    %p53 = scmp.eq.s32.totalorder %s8, 0
    %p54 = por %p52, %p53
    %p55 = scmp.ne.s32.totalorder %s44, %s47
    %p56 = scmp.eq.s32.totalorder %s13, 1
    %p57 = por %p55, %p56
    %p58 = scmp.ne.s32.totalorder %s47, %s48
    %p59 = scmp.eq.s32.totalorder %s13, 0
    %p60 = por %p58, %p59
    %p61 = scmp.ne.s32.totalorder %s47, %s48
    %p62 = scmp.eq.s32.totalorder %s14, 1
    %p63 = por %p61, %p62
    %p65 = scmp.ne.s32.totalorder %s48, %s64
    %p66 = scmp.eq.s32.totalorder %s14, 0
    %p67 = por %p65, %p66
    %s68 = ssub.s32 %s8, %s15
    %p69 = scmp.eq.s32.totalorder %s68, 0
    %s71 = sadd.s32 %s70, 1
    %s72 = scalar_select %p69, %s70, %s71
    %p75 = pneg %p69
    %p76 = scmp.eq.s32.totalorder %s8, 1
    %p77 = por %p75, %p76
    %p78 = scmp.ne.s32.totalorder %s70, %s73
    %p79 = scmp.eq.s32.totalorder %s8, 0
    %p80 = por %p78, %p79
    %p81 = scmp.ne.s32.totalorder %s70, %s73
    %p82 = scmp.eq.s32.totalorder %s13, 1
    %p83 = por %p81, %p82
    %p84 = scmp.ne.s32.totalorder %s73, %s74
    %p85 = scmp.eq.s32.totalorder %s13, 0
    %p86 = por %p84, %p85
    %p87 = scmp.ne.s32.totalorder %s73, %s74
    %p88 = scmp.eq.s32.totalorder %s14, 1
    %p89 = por %p87, %p88
    %p91 = scmp.ne.s32.totalorder %s74, %s90
    %p92 = scmp.eq.s32.totalorder %s14, 0
    %p93 = por %p91, %p92
    %p94 = scmp.le.s32.totalorder 1, %s8
    %p95 = scmp.lt.s32.totalorder %s8, 3
    %p96 = pnand %p94, %p95
    %p97 = pneg %p96
    // Predicated region
    $region9: #{hybrid_wann_gpt_forward.18} parent=5 // pred_check
      _
    $region10: #{hybrid_wann_gpt_forward.18} parent=5 // pred_check_branch
      %99 = sbr.rel (%p96) target = $region12
    $region11: #{hybrid_wann_gpt_forward.18} parent=5 // pred_region
      %s100 = ssub.s32 %s8, 1
    $region12: #{hybrid_wann_gpt_forward.18} parent=5 // pred_fallthru
      _
    %p101 = scmp.lt.s32.totalorder %s8, 2
    // Predicated region
    $region13: #{hybrid_wann_gpt_forward.18} parent=5 // pred_check
      %p102 = pneg %p101
    $region14: #{hybrid_wann_gpt_forward.18} parent=5 // pred_check_branch
      %104 = sbr.rel (%p102) target = $region16
    $region15: #{hybrid_wann_gpt_forward.18} parent=5 // pred_region
      // Predicated region
      $region17: #{hybrid_wann_gpt_forward.18} parent=15 // pred_check
        %p105 = pneg %p28
      $region18: #{hybrid_wann_gpt_forward.18} parent=15 // pred_check_branch
        %107 = sbr.rel (%p105) target = $region20
      $region19: #{hybrid_wann_gpt_forward.18} parent=15 // pred_region
        %p108 = scmp.lt.s32.totalorder %s8, 1
        %s109 = scalar_select %p108, %s8, 1
        %s110 = scalar_lea.vmem %s0, %s109
      $region20: #{hybrid_wann_gpt_forward.18} parent=15 // pred_fallthru
        _
      // Predicated region
      $region21: #{hybrid_wann_gpt_forward.18} parent=15 // pred_check
        %p111 = pneg %p54
      $region22: #{hybrid_wann_gpt_forward.18} parent=15 // pred_check_branch
        %113 = sbr.rel (%p111) target = $region24
      $region23: #{hybrid_wann_gpt_forward.18} parent=15 // pred_region
        %p114 = scmp.lt.s32.totalorder %s8, 1
        %s115 = scalar_select %p114, %s8, 1
        %s116 = smul.addr %s115, 2
        %s117 = smul.addr %s116, 4
        %s118 = scalar_lea.vmem %s1, %s117
      $region24: #{hybrid_wann_gpt_forward.18} parent=15 // pred_fallthru
        _
    $region16: #{hybrid_wann_gpt_forward.18} parent=5 // pred_fallthru
      _
    %p119 = scmp.le.s32.totalorder 1, %s8
    %p120 = scmp.lt.s32.totalorder %s8, 3
    %p121 = pnand %p119, %p120
    %p122 = pneg %p121
    // Predicated region
    $region25: #{hybrid_wann_gpt_forward.18} parent=5 // pred_check
      _
    $region26: #{hybrid_wann_gpt_forward.18} parent=5 // pred_check_branch
      %124 = sbr.rel (%p121) target = $region28
    $region27: #{hybrid_wann_gpt_forward.18} parent=5 // pred_region
      %s125 = ssub.s32 %s8, 1
      %p126 = scmp.lt.s32.totalorder %s13, 1
      %s127 = scalar_select %p126, %s13, 1
      %s128 = scalar_lea.vmem %s0, %s127
      %p129 = pneg %p34
      %p130 = pneg %p31
      %p131 = scmp.lt.s32.totalorder %s13, 1
      %s132 = scalar_select %p131, %s13, 1
      %s133 = smul.addr %s132, 2
      %s134 = smul.addr %s133, 4
      %s135 = scalar_lea.vmem %s1, %s134
      %p136 = pneg %p60
      %p137 = pneg %p57
      %p138 = pneg %p86
      %p139 = pneg %p83
      %p140 = scmp.lt.s32.totalorder %s13, 1
      %s141 = scalar_select %p140, %s13, 1
      %s142 = smul.addr %s141, 4
      %s143 = scalar_lea.vmem %s2, %s142
      %p144 = scmp.lt.s32.totalorder %s13, 1
      %s145 = scalar_select %p144, %s13, 1
      %s146 = scalar_lea.vmem %s0, %s145
      %p147 = scmp.lt.s32.totalorder %s13, 1
      %s148 = scalar_select %p147, %s13, 1
      %s149 = smul.addr %s148, 2
      %s150 = smul.addr %s149, 4
      %s151 = scalar_lea.vmem %s1, %s150
      %p152 = scmp.lt.s32.totalorder %s13, 1
      %s153 = scalar_select %p152, %s13, 1
      %s154 = smul.addr %s153, 4
      %s155 = scalar_lea.vmem %s2, %s154
      %v157 = vld [vmem:[%s146] sm:$0x1]
      %v158 = vlaneseq
      %v159 = vshrl.u32 %v158, 7
      %v160 = vlaneseq
      %v161 = vand.u32 %v160, 127
      %vm162 = vcmp.le.s32.totalorder %v161, %v159
      %vm163 = vcmp.gt.f32.partialorder %v157, 0.5
      %v164 = vsel %vm163, 1, 0
      %v165 = vlaneseq
      %v166 = vshrl.u32 %v165, 7
      %v167 = vsub.s32 0, %v166
      %v168 = vrot.slane %v164, %v167
      %vm169 = vcmp.eq.s32.totalorder %v168, 1
      %vm170 = vmand %vm162, %vm169
      %v171 = vsel %vm170, 0.0, -1e+09
      %v172 = vld [vmem:[%s151] sm:$0xff]
      %v174 = vunpack.c.l.b16 %v172
      %v175 = vpack.c.b16 %v174, %v174
      %176 = vrot.lane.b32.xlu0 %v175, 64
      %v177 = vpop.permute.xlu0 %176
      %vm178 = vcmask 130048
      %v180 = vsel %vm178, %v172, 0
      %v183 = vsel %vm178, %v177, 0
      %185 = vmatprep.subr.bf16.mxu0 0
      %186 = vmatpush1.bf16.xpose.msra.mxu0 %v183
      %187 = vmatprep.subr.bf16.mxu0 0
      %188 = vmatpush1.bf16.xpose.msra.mxu0 0
      %189 = vmatprep.subr.bf16.mxu0 0
      %190 = vmatpush1.bf16.xpose.msra.mxu0 0
      %191 = vmatprep.subr.bf16.mxu0 0
      %192 = vmatpush1.bf16.xpose.msra.mxu0 0
      %193 = vmatprep.subr.bf16.mxu0 0
      %194 = vmatpush1.bf16.xpose.msra.mxu0 0
      %195 = vmatprep.subr.bf16.mxu0 0
      %196 = vmatpush1.bf16.xpose.msra.mxu0 0
      %197 = vmatprep.subr.bf16.mxu0 0
      %198 = vmatpush1.bf16.xpose.msra.mxu0 0
      %199 = vmatprep.subr.bf16.mxu0 0
      %200 = vmatpush1.bf16.xpose.msra.mxu0 0
      %201 = vmatprep.subr.bf16.mxu0 0
      %202 = vmatpush1.bf16.xpose.msra.mxu0 0
      %203 = vmatprep.subr.bf16.mxu0 0
      %204 = vmatpush1.bf16.xpose.msra.mxu0 0
      %205 = vmatprep.subr.bf16.mxu0 0
      %206 = vmatpush1.bf16.xpose.msra.mxu0 0
      %207 = vmatprep.subr.bf16.mxu0 0
      %208 = vmatpush1.bf16.xpose.msra.mxu0 0
      %209 = vmatprep.subr.bf16.mxu0 0
      %210 = vmatpush1.bf16.xpose.msra.mxu0 0
      %211 = vmatprep.subr.bf16.mxu0 0
      %212 = vmatpush1.bf16.xpose.msra.mxu0 0
      %213 = vmatprep.subr.bf16.mxu0 0
      %214 = vmatpush1.bf16.xpose.msra.mxu0 0
      %215 = vmatprep.subr.bf16.mxu0 0
      %216 = vmatpush1.bf16.xpose.msra.mxu0 0
      %217 = vmatprep.mubr.bf16.mxu0 0
      %218 = vmatmul.mubr.bf16.gmra.mrb[0].mxu0 %v180
      %v219 = vpop.f32.mrb[0].mxu0
      %v220 = vadd.f32 0.0, %v219
      %v221 = vpop.f32.mrb[0].mxu0
      %v222 = vpop.f32.mrb[0].mxu0
      %v223 = vpop.f32.mrb[0].mxu0
      %224 = vdwg.mxu0
      %v225 = vmul.f32 %v220, 0.25
      %v226 = vadd.f32 %v225, %v171
      %vm227 = vcmask 64512
      %v228 = vsel %vm227, %v226, -inf
      %229 = vmax.xlane.f32.xlu0 %v228
      %v230 = vpop.xlane.xlu0 %229
      %v231 = vsub.f32 %v226, %v230
      %v232 = vmul.f32 %v231, 1.442695
      %v233 = vpow.pop %v232
      %v234 = vsel %vm227, %v233, 0.0
      %235 = vadd.xlane.f32.xlu0 %v234
      %v236 = vpop.xlane.xlu0 %235
      %v237 = vrcp.pop %v236
      %v238 = vmul.f32 %v233, %v237
      %v239 = vpack.c.bf16 %v238, %v238
      %v240 = vunpack.c.h.b16 %v172
      %v241 = vpack.c.b16 %v240, %v240
      %v243 = vsel %vm227, %v239, 0
      %vm245 = vcmask 1043456
      %v247 = vsel %vm245, %v241, 0
      %249 = vmatprep.subr.bf16.mxu0 0
      %250 = vmatpush1.bf16.msra.mxu0 %v247
      %251 = vmatprep.subr.bf16.mxu0 0
      %252 = vmatpush1.bf16.msra.mxu0 0
      %253 = vmatprep.subr.bf16.mxu0 0
      %254 = vmatpush1.bf16.msra.mxu0 0
      %255 = vmatprep.subr.bf16.mxu0 0
      %256 = vmatpush1.bf16.msra.mxu0 0
      %257 = vmatprep.subr.bf16.mxu0 0
      %258 = vmatpush1.bf16.msra.mxu0 0
      %259 = vmatprep.subr.bf16.mxu0 0
      %260 = vmatpush1.bf16.msra.mxu0 0
      %261 = vmatprep.subr.bf16.mxu0 0
      %262 = vmatpush1.bf16.msra.mxu0 0
      %263 = vmatprep.subr.bf16.mxu0 0
      %264 = vmatpush1.bf16.msra.mxu0 0
      %265 = vmatprep.subr.bf16.mxu0 0
      %266 = vmatpush1.bf16.msra.mxu0 0
      %267 = vmatprep.subr.bf16.mxu0 0
      %268 = vmatpush1.bf16.msra.mxu0 0
      %269 = vmatprep.subr.bf16.mxu0 0
      %270 = vmatpush1.bf16.msra.mxu0 0
      %271 = vmatprep.subr.bf16.mxu0 0
      %272 = vmatpush1.bf16.msra.mxu0 0
      %273 = vmatprep.subr.bf16.mxu0 0
      %274 = vmatpush1.bf16.msra.mxu0 0
      %275 = vmatprep.subr.bf16.mxu0 0
      %276 = vmatpush1.bf16.msra.mxu0 0
      %277 = vmatprep.subr.bf16.mxu0 0
      %278 = vmatpush1.bf16.msra.mxu0 0
      %279 = vmatprep.subr.bf16.mxu0 0
      %280 = vmatpush1.bf16.msra.mxu0 0
      %281 = vmatprep.mubr.bf16.mxu0 0
      %282 = vmatmul.mubr.bf16.gmra.mrb[0].mxu0 %v243
      %v283 = vpop.f32.mrb[0].mxu0
      %v284 = vadd.f32 0.0, %v283
      %v285 = vpop.f32.mrb[0].mxu0
      %v286 = vpop.f32.mrb[0].mxu0
      %v287 = vpop.f32.mrb[0].mxu0
      %288 = vdwg.mxu0
      %v289 = vpack.c.bf16 %v284, %v284
      %290 = vrot.lane.b32.xlu0 %v175, 112
      %v291 = vpop.permute.xlu0 %290
      %292 = vrot.lane.b32.xlu0 %v175, 48
      %v293 = vpop.permute.xlu0 %292
      %v295 = vsel %vm178, %v291, 0
      %v298 = vsel %vm178, %v293, 0
      %300 = vmatprep.subr.bf16.mxu0 0
      %301 = vmatpush1.bf16.xpose.msra.mxu0 %v298
      %302 = vmatprep.subr.bf16.mxu0 0
      %303 = vmatpush1.bf16.xpose.msra.mxu0 0
      %304 = vmatprep.subr.bf16.mxu0 0
      %305 = vmatpush1.bf16.xpose.msra.mxu0 0
      %306 = vmatprep.subr.bf16.mxu0 0
      %307 = vmatpush1.bf16.xpose.msra.mxu0 0
      %308 = vmatprep.subr.bf16.mxu0 0
      %309 = vmatpush1.bf16.xpose.msra.mxu0 0
      %310 = vmatprep.subr.bf16.mxu0 0
      %311 = vmatpush1.bf16.xpose.msra.mxu0 0
      %312 = vmatprep.subr.bf16.mxu0 0
      %313 = vmatpush1.bf16.xpose.msra.mxu0 0
      %314 = vmatprep.subr.bf16.mxu0 0
      %315 = vmatpush1.bf16.xpose.msra.mxu0 0
      %316 = vmatprep.subr.bf16.mxu0 0
      %317 = vmatpush1.bf16.xpose.msra.mxu0 0
      %318 = vmatprep.subr.bf16.mxu0 0
      %319 = vmatpush1.bf16.xpose.msra.mxu0 0
      %320 = vmatprep.subr.bf16.mxu0 0
      %321 = vmatpush1.bf16.xpose.msra.mxu0 0
      %322 = vmatprep.subr.bf16.mxu0 0
      %323 = vmatpush1.bf16.xpose.msra.mxu0 0
      %324 = vmatprep.subr.bf16.mxu0 0
      %325 = vmatpush1.bf16.xpose.msra.mxu0 0
      %326 = vmatprep.subr.bf16.mxu0 0
      %327 = vmatpush1.bf16.xpose.msra.mxu0 0
      %328 = vmatprep.subr.bf16.mxu0 0
      %329 = vmatpush1.bf16.xpose.msra.mxu0 0
      %330 = vmatprep.subr.bf16.mxu0 0
      %331 = vmatpush1.bf16.xpose.msra.mxu0 0
      %332 = vmatprep.mubr.bf16.mxu0 0
      %333 = vmatmul.mubr.bf16.gmra.mrb[0].mxu0 %v295
      %v334 = vpop.f32.mrb[0].mxu0
      %v335 = vadd.f32 0.0, %v334
      %v336 = vpop.f32.mrb[0].mxu0
      %v337 = vpop.f32.mrb[0].mxu0
      %v338 = vpop.f32.mrb[0].mxu0
      %339 = vdwg.mxu0
      %v340 = vmul.f32 %v335, 0.25
      %v341 = vadd.f32 %v340, %v171
      %v342 = vsel %vm227, %v341, -inf
      %343 = vmax.xlane.f32.xlu0 %v342
      %v344 = vpop.xlane.xlu0 %343
      %v345 = vsub.f32 %v341, %v344
      %v346 = vmul.f32 %v345, 1.442695
      %v347 = vpow.pop %v346
      %v348 = vsel %vm227, %v347, 0.0
      %349 = vadd.xlane.f32.xlu0 %v348
      %v350 = vpop.xlane.xlu0 %349
      %v351 = vrcp.pop %v350
      %v352 = vmul.f32 %v347, %v351
      %v353 = vpack.c.bf16 %v352, %v352
      %354 = vrot.lane.b32.xlu0 %v241, 112
      %v355 = vpop.permute.xlu0 %354
      %v357 = vsel %vm227, %v353, 0
      %v360 = vsel %vm245, %v355, 0
      %362 = vmatprep.subr.bf16.mxu0 0
      %363 = vmatpush1.bf16.msra.mxu0 %v360
      %364 = vmatprep.subr.bf16.mxu0 0
      %365 = vmatpush1.bf16.msra.mxu0 0
      %366 = vmatprep.subr.bf16.mxu0 0
      %367 = vmatpush1.bf16.msra.mxu0 0
      %368 = vmatprep.subr.bf16.mxu0 0
      %369 = vmatpush1.bf16.msra.mxu0 0
      %370 = vmatprep.subr.bf16.mxu0 0
      %371 = vmatpush1.bf16.msra.mxu0 0
      %372 = vmatprep.subr.bf16.mxu0 0
      %373 = vmatpush1.bf16.msra.mxu0 0
      %374 = vmatprep.subr.bf16.mxu0 0
      %375 = vmatpush1.bf16.msra.mxu0 0
      %376 = vmatprep.subr.bf16.mxu0 0
      %377 = vmatpush1.bf16.msra.mxu0 0
      %378 = vmatprep.subr.bf16.mxu0 0
      %379 = vmatpush1.bf16.msra.mxu0 0
      %380 = vmatprep.subr.bf16.mxu0 0
      %381 = vmatpush1.bf16.msra.mxu0 0
      %382 = vmatprep.subr.bf16.mxu0 0
      %383 = vmatpush1.bf16.msra.mxu0 0
      %384 = vmatprep.subr.bf16.mxu0 0
      %385 = vmatpush1.bf16.msra.mxu0 0
      %386 = vmatprep.subr.bf16.mxu0 0
      %387 = vmatpush1.bf16.msra.mxu0 0
      %388 = vmatprep.subr.bf16.mxu0 0
      %389 = vmatpush1.bf16.msra.mxu0 0
      %390 = vmatprep.subr.bf16.mxu0 0
      %391 = vmatpush1.bf16.msra.mxu0 0
      %392 = vmatprep.subr.bf16.mxu0 0
      %393 = vmatpush1.bf16.msra.mxu0 0
      %394 = vmatprep.mubr.bf16.mxu0 0
      %395 = vmatmul.mubr.bf16.gmra.mrb[0].mxu0 %v357
      %v396 = vpop.f32.mrb[0].mxu0
      %v397 = vadd.f32 0.0, %v396
      %v398 = vpop.f32.mrb[0].mxu0
      %v399 = vpop.f32.mrb[0].mxu0
      %v400 = vpop.f32.mrb[0].mxu0
      %401 = vdwg.mxu0
      %v402 = vpack.c.bf16 %v397, %v397
      %403 = vrot.lane.b32.xlu0 %v175, 96
      %v404 = vpop.permute.xlu0 %403
      %405 = vrot.lane.b32.xlu0 %v175, 32
      %v406 = vpop.permute.xlu0 %405
      %v408 = vsel %vm178, %v404, 0
      %v411 = vsel %vm178, %v406, 0
      %413 = vmatprep.subr.bf16.mxu0 0
      %414 = vmatpush1.bf16.xpose.msra.mxu0 %v411
      %415 = vmatprep.subr.bf16.mxu0 0
      %416 = vmatpush1.bf16.xpose.msra.mxu0 0
      %417 = vmatprep.subr.bf16.mxu0 0
      %418 = vmatpush1.bf16.xpose.msra.mxu0 0
      %419 = vmatprep.subr.bf16.mxu0 0
      %420 = vmatpush1.bf16.xpose.msra.mxu0 0
      %421 = vmatprep.subr.bf16.mxu0 0
      %422 = vmatpush1.bf16.xpose.msra.mxu0 0
      %423 = vmatprep.subr.bf16.mxu0 0
      %424 = vmatpush1.bf16.xpose.msra.mxu0 0
      %425 = vmatprep.subr.bf16.mxu0 0
      %426 = vmatpush1.bf16.xpose.msra.mxu0 0
      %427 = vmatprep.subr.bf16.mxu0 0
      %428 = vmatpush1.bf16.xpose.msra.mxu0 0
      %429 = vmatprep.subr.bf16.mxu0 0
      %430 = vmatpush1.bf16.xpose.msra.mxu0 0
      %431 = vmatprep.subr.bf16.mxu0 0
      %432 = vmatpush1.bf16.xpose.msra.mxu0 0
      %433 = vmatprep.subr.bf16.mxu0 0
      %434 = vmatpush1.bf16.xpose.msra.mxu0 0
      %435 = vmatprep.subr.bf16.mxu0 0
      %436 = vmatpush1.bf16.xpose.msra.mxu0 0
      %437 = vmatprep.subr.bf16.mxu0 0
      %438 = vmatpush1.bf16.xpose.msra.mxu0 0
      %439 = vmatprep.subr.bf16.mxu0 0
      %440 = vmatpush1.bf16.xpose.msra.mxu0 0
      %441 = vmatprep.subr.bf16.mxu0 0
      %442 = vmatpush1.bf16.xpose.msra.mxu0 0
      %443 = vmatprep.subr.bf16.mxu0 0
      %444 = vmatpush1.bf16.xpose.msra.mxu0 0
      %445 = vmatprep.mubr.bf16.mxu0 0
      %446 = vmatmul.mubr.bf16.gmra.mrb[0].mxu0 %v408
      %v447 = vpop.f32.mrb[0].mxu0
      %v448 = vadd.f32 0.0, %v447
      %v449 = vpop.f32.mrb[0].mxu0
      %v450 = vpop.f32.mrb[0].mxu0
      %v451 = vpop.f32.mrb[0].mxu0
      %452 = vdwg.mxu0
      %v453 = vmul.f32 %v448, 0.25
      %v454 = vadd.f32 %v453, %v171
      %v455 = vsel %vm227, %v454, -inf
      %456 = vmax.xlane.f32.xlu0 %v455
      %v457 = vpop.xlane.xlu0 %456
      %v458 = vsub.f32 %v454, %v457
      %v459 = vmul.f32 %v458, 1.442695
      %v460 = vpow.pop %v459
      %v461 = vsel %vm227, %v460, 0.0
      %462 = vadd.xlane.f32.xlu0 %v461
      %v463 = vpop.xlane.xlu0 %462
      %v464 = vrcp.pop %v463
      %v465 = vmul.f32 %v460, %v464
      %v466 = vpack.c.bf16 %v465, %v465
      %467 = vrot.lane.b32.xlu0 %v241, 96
      %v468 = vpop.permute.xlu0 %467
      %v470 = vsel %vm227, %v466, 0
      %v473 = vsel %vm245, %v468, 0
      %475 = vmatprep.subr.bf16.mxu0 0
      %476 = vmatpush1.bf16.msra.mxu0 %v473
      %477 = vmatprep.subr.bf16.mxu0 0
      %478 = vmatpush1.bf16.msra.mxu0 0
      %479 = vmatprep.subr.bf16.mxu0 0
      %480 = vmatpush1.bf16.msra.mxu0 0
      %481 = vmatprep.subr.bf16.mxu0 0
      %482 = vmatpush1.bf16.msra.mxu0 0
      %483 = vmatprep.subr.bf16.mxu0 0
      %484 = vmatpush1.bf16.msra.mxu0 0
      %485 = vmatprep.subr.bf16.mxu0 0
      %486 = vmatpush1.bf16.msra.mxu0 0
      %487 = vmatprep.subr.bf16.mxu0 0
      %488 = vmatpush1.bf16.msra.mxu0 0
      %489 = vmatprep.subr.bf16.mxu0 0
      %490 = vmatpush1.bf16.msra.mxu0 0
      %491 = vmatprep.subr.bf16.mxu0 0
      %492 = vmatpush1.bf16.msra.mxu0 0
      %493 = vmatprep.subr.bf16.mxu0 0
      %494 = vmatpush1.bf16.msra.mxu0 0
      %495 = vmatprep.subr.bf16.mxu0 0
      %496 = vmatpush1.bf16.msra.mxu0 0
      %497 = vmatprep.subr.bf16.mxu0 0
      %498 = vmatpush1.bf16.msra.mxu0 0
      %499 = vmatprep.subr.bf16.mxu0 0
      %500 = vmatpush1.bf16.msra.mxu0 0
      %501 = vmatprep.subr.bf16.mxu0 0
      %502 = vmatpush1.bf16.msra.mxu0 0
      %503 = vmatprep.subr.bf16.mxu0 0
      %504 = vmatpush1.bf16.msra.mxu0 0
      %505 = vmatprep.subr.bf16.mxu0 0
      %506 = vmatpush1.bf16.msra.mxu0 0
      %507 = vmatprep.mubr.bf16.mxu0 0
      %508 = vmatmul.mubr.bf16.gmra.mrb[0].mxu0 %v470
      %v509 = vpop.f32.mrb[0].mxu0
      %v510 = vadd.f32 0.0, %v509
      %v511 = vpop.f32.mrb[0].mxu0
      %v512 = vpop.f32.mrb[0].mxu0
      %v513 = vpop.f32.mrb[0].mxu0
      %514 = vdwg.mxu0
      %v515 = vpack.c.bf16 %v510, %v510
      %516 = vrot.lane.b32.xlu0 %v175, 80
      %v517 = vpop.permute.xlu0 %516
      %518 = vrot.lane.b32.xlu0 %v175, 16
      %v519 = vpop.permute.xlu0 %518
      %v521 = vsel %vm178, %v517, 0
      %v524 = vsel %vm178, %v519, 0
      %526 = vmatprep.subr.bf16.mxu0 0
      %527 = vmatpush1.bf16.xpose.msra.mxu0 %v524
      %528 = vmatprep.subr.bf16.mxu0 0
      %529 = vmatpush1.bf16.xpose.msra.mxu0 0
      %530 = vmatprep.subr.bf16.mxu0 0
      %531 = vmatpush1.bf16.xpose.msra.mxu0 0
      %532 = vmatprep.subr.bf16.mxu0 0
      %533 = vmatpush1.bf16.xpose.msra.mxu0 0
      %534 = vmatprep.subr.bf16.mxu0 0
      %535 = vmatpush1.bf16.xpose.msra.mxu0 0
      %536 = vmatprep.subr.bf16.mxu0 0
      %537 = vmatpush1.bf16.xpose.msra.mxu0 0
      %538 = vmatprep.subr.bf16.mxu0 0
      %539 = vmatpush1.bf16.xpose.msra.mxu0 0
      %540 = vmatprep.subr.bf16.mxu0 0
      %541 = vmatpush1.bf16.xpose.msra.mxu0 0
      %542 = vmatprep.subr.bf16.mxu0 0
      %543 = vmatpush1.bf16.xpose.msra.mxu0 0
      %544 = vmatprep.subr.bf16.mxu0 0
      %545 = vmatpush1.bf16.xpose.msra.mxu0 0
      %546 = vmatprep.subr.bf16.mxu0 0
      %547 = vmatpush1.bf16.xpose.msra.mxu0 0
      %548 = vmatprep.subr.bf16.mxu0 0
      %549 = vmatpush1.bf16.xpose.msra.mxu0 0
      %550 = vmatprep.subr.bf16.mxu0 0
      %551 = vmatpush1.bf16.xpose.msra.mxu0 0
      %552 = vmatprep.subr.bf16.mxu0 0
      %553 = vmatpush1.bf16.xpose.msra.mxu0 0
      %554 = vmatprep.subr.bf16.mxu0 0
      %555 = vmatpush1.bf16.xpose.msra.mxu0 0
      %556 = vmatprep.subr.bf16.mxu0 0
      %557 = vmatpush1.bf16.xpose.msra.mxu0 0
      %558 = vmatprep.mubr.bf16.mxu0 0
      %559 = vmatmul.mubr.bf16.gmra.mrb[0].mxu0 %v521
      %v560 = vpop.f32.mrb[0].mxu0
      %v561 = vadd.f32 0.0, %v560
      %v562 = vpop.f32.mrb[0].mxu0
      %v563 = vpop.f32.mrb[0].mxu0
      %v564 = vpop.f32.mrb[0].mxu0
      %565 = vdwg.mxu0
      %v566 = vmul.f32 %v561, 0.25
      %v567 = vadd.f32 %v566, %v171
      %v568 = vsel %vm227, %v567, -inf
      %569 = vmax.xlane.f32.xlu0 %v568
      %v570 = vpop.xlane.xlu0 %569
      %v571 = vsub.f32 %v567, %v570
      %v572 = vmul.f32 %v571, 1.442695
      %v573 = vpow.pop %v572
      %v574 = vsel %vm227, %v573, 0.0
      %575 = vadd.xlane.f32.xlu0 %v574
      %v576 = vpop.xlane.xlu0 %575
      %v577 = vrcp.pop %v576
      %v578 = vmul.f32 %v573, %v577
      %v579 = vpack.c.bf16 %v578, %v578
      %580 = vrot.lane.b32.xlu0 %v241, 80
      %v581 = vpop.permute.xlu0 %580
      %v583 = vsel %vm227, %v579, 0
      %v586 = vsel %vm245, %v581, 0
      %588 = vmatprep.subr.bf16.mxu0 0
      %589 = vmatpush1.bf16.msra.mxu0 %v586
      %590 = vmatprep.subr.bf16.mxu0 0
      %591 = vmatpush1.bf16.msra.mxu0 0
      %592 = vmatprep.subr.bf16.mxu0 0
      %593 = vmatpush1.bf16.msra.mxu0 0
      %594 = vmatprep.subr.bf16.mxu0 0
      %595 = vmatpush1.bf16.msra.mxu0 0
      %596 = vmatprep.subr.bf16.mxu0 0
      %597 = vmatpush1.bf16.msra.mxu0 0
      %598 = vmatprep.subr.bf16.mxu0 0
      %599 = vmatpush1.bf16.msra.mxu0 0
      %600 = vmatprep.subr.bf16.mxu0 0
      %601 = vmatpush1.bf16.msra.mxu0 0
      %602 = vmatprep.subr.bf16.mxu0 0
      %603 = vmatpush1.bf16.msra.mxu0 0
      %604 = vmatprep.subr.bf16.mxu0 0
      %605 = vmatpush1.bf16.msra.mxu0 0
      %606 = vmatprep.subr.bf16.mxu0 0
      %607 = vmatpush1.bf16.msra.mxu0 0
      %608 = vmatprep.subr.bf16.mxu0 0
      %609 = vmatpush1.bf16.msra.mxu0 0
      %610 = vmatprep.subr.bf16.mxu0 0
      %611 = vmatpush1.bf16.msra.mxu0 0
      %612 = vmatprep.subr.bf16.mxu0 0
      %613 = vmatpush1.bf16.msra.mxu0 0
      %614 = vmatprep.subr.bf16.mxu0 0
      %615 = vmatpush1.bf16.msra.mxu0 0
      %616 = vmatprep.subr.bf16.mxu0 0
      %617 = vmatpush1.bf16.msra.mxu0 0
      %618 = vmatprep.subr.bf16.mxu0 0
      %619 = vmatpush1.bf16.msra.mxu0 0
      %620 = vmatprep.mubr.bf16.mxu0 0
      %621 = vmatmul.mubr.bf16.gmra.mrb[0].mxu0 %v583
      %v622 = vpop.f32.mrb[0].mxu0
      %v623 = vadd.f32 0.0, %v622
      %v624 = vpop.f32.mrb[0].mxu0
      %v625 = vpop.f32.mrb[0].mxu0
      %v626 = vpop.f32.mrb[0].mxu0
      %627 = vdwg.mxu0
      %v628 = vpack.c.bf16 %v623, %v623
      %630 = vrot.lane.b32.xlu0 %v402, 16
      %v631 = vpop.permute.xlu0 %630
      %633 = vrot.lane.b32.xlu0 %v515, 32
      %v634 = vpop.permute.xlu0 %633
      %636 = vrot.lane.b32.xlu0 %v628, 48
      %v637 = vpop.permute.xlu0 %636
      %v640 = vsel %vm178, %v289, %v631
      %vm641 = vcmask 261120
      %v643 = vsel %vm641, %v640, %v634
      %vm644 = vcmask 392192
      %v646 = vsel %vm644, %v643, %v637
      %vm648 = vcmask 519168
      %649 = vst.msk [vmem:[%s155] sm:$0xf] %vm648, %v646
      %p650 = scmp.lt.s32.totalorder %s13, 1
      %s651 = scalar_select %p650, %s13, 1
      %s652 = smul.addr %s651, 4
      %s653 = scalar_lea.vmem %s2, %s652
      // Predicated region
      $region29: #{hybrid_wann_gpt_forward.18} parent=27 // pred_check
        %p654 = pneg %p83
      $region30: #{hybrid_wann_gpt_forward.18} parent=27 // pred_check_branch
        %656 = sbr.rel (%p654) target = $region32
      $region31: #{hybrid_wann_gpt_forward.18} parent=27 // pred_region
        _
      $region32: #{hybrid_wann_gpt_forward.18} parent=27 // pred_fallthru
        _
    $region28: #{hybrid_wann_gpt_forward.18} parent=5 // pred_fallthru
      _
    %p657 = scmp.le.s32.totalorder 2, %s8
    // Predicated region
    $region33: #{hybrid_wann_gpt_forward.18} parent=5 // pred_check
      %p658 = pneg %p657
    $region34: #{hybrid_wann_gpt_forward.18} parent=5 // pred_check_branch
      %660 = sbr.rel (%p658) target = $region36
    $region35: #{hybrid_wann_gpt_forward.18} parent=5 // pred_region
      %s661 = ssub.s32 %s8, 2
      // Predicated region
      $region37: #{hybrid_wann_gpt_forward.18} parent=35 // pred_check
        %p662 = pneg %p89
      $region38: #{hybrid_wann_gpt_forward.18} parent=35 // pred_check_branch
        %664 = sbr.rel (%p662) target = $region40
      $region39: #{hybrid_wann_gpt_forward.18} parent=35 // pred_region
        %p665 = scmp.lt.s32.totalorder %s14, 1
        %s666 = scalar_select %p665, %s14, 1
        %s667 = smul.addr %s666, 4
        %s668 = scalar_lea.vmem %s2, %s667
      $region40: #{hybrid_wann_gpt_forward.18} parent=35 // pred_fallthru
        _
    $region36: #{hybrid_wann_gpt_forward.18} parent=5 // pred_fallthru
      _
  $region6: #{hybrid_wann_gpt_forward.18} parent=0 // loop_footer
    %s12 = sadd.s32 1, %s8
  $region7: #{hybrid_wann_gpt_forward.18} parent=0 // loop_footer_branch
    %7 = sbr.rel target = $region3
  $region8: #{hybrid_wann_gpt_forward.18} parent=0 // loop_exit
    _

// kernel: hybrid_wann_gpt_forward.21
$region0: #{hybrid_wann_gpt_forward.21}
  #allocation0 [shape = 'u32[]', space=smem, size = 0x4, offset = 0x4, fixed_abs, tag = 'smem constant byte address 0x4 - core index']
  #allocation1 [shape = 'u32[144,128]{1,0:T(1,128)}', space=vmem, size = 0x12000, scoped, tag = 'internal scratch']
  #allocation2 [shape = 'f32[16,256]{1,0:T(8,128)}', space=vmem, size = 0x4000, scoped, tag = 'scratch operand']
  %s0 = inlined_call_operand.vmem [shape: bf16[16,64], index: 0, kind: input, shape index: {}]
  %s1 = inlined_call_operand.vmem [shape: bf16[64,256], index: 1, kind: input, shape index: {}]
  %s2 = inlined_call_operand.vmem [shape: f32[1,256], index: 2, kind: input, shape index: {}]
  %s3 = inlined_call_operand.vmem [shape: bf16[16,256], index: 3, kind: output, shape index: {}]
  %s4 = sld [smem:[#allocation0]]
  $region30: #{hybrid_wann_gpt_forward.21} parent=0
    _
  %s6 = ssub.s32 1, %s4
  %s7 = scalar_select 0, %s6, %s4
  // Predicated region
  $region2: #{hybrid_wann_gpt_forward.21} parent=0 // pred_check
    _
  $region3: #{hybrid_wann_gpt_forward.21} parent=0 // pred_check_branch
    %9 = sbr.rel (0) target = $region5
  $region4: #{hybrid_wann_gpt_forward.21} parent=0 // pred_region
    _
  $region5: #{hybrid_wann_gpt_forward.21} parent=0 // pred_fallthru
    _
  // Predicated region
  $region6: #{hybrid_wann_gpt_forward.21} parent=0 // pred_check
    _
  $region7: #{hybrid_wann_gpt_forward.21} parent=0 // pred_check_branch
    %11 = sbr.rel (0) target = $region9
  $region8: #{hybrid_wann_gpt_forward.21} parent=0 // pred_region
    _
  $region9: #{hybrid_wann_gpt_forward.21} parent=0 // pred_fallthru
    _
  // Predicated region
  $region10: #{hybrid_wann_gpt_forward.21} parent=0 // pred_check
    _
  $region11: #{hybrid_wann_gpt_forward.21} parent=0 // pred_check_branch
    %13 = sbr.rel (0) target = $region13
  $region12: #{hybrid_wann_gpt_forward.21} parent=0 // pred_region
    _
  $region13: #{hybrid_wann_gpt_forward.21} parent=0 // pred_fallthru
    _
  %p15 = scmp.eq.s32.totalorder 0, 0
  // Predicated region
  $region14: #{hybrid_wann_gpt_forward.21} parent=0 // pred_check
    %p16 = pneg %p15
  $region15: #{hybrid_wann_gpt_forward.21} parent=0 // pred_check_branch
    %18 = sbr.rel (%p16) target = $region17
  $region16: #{hybrid_wann_gpt_forward.21} parent=0 // pred_region
    %19 = vst [vmem:[#allocation2] sm:$0xff] 0.0
    %20 = vst [vmem:[#allocation2 + $0x8] sm:$0xff] 0.0
    %21 = vst [vmem:[#allocation2 + $0x10] sm:$0xff] 0.0
    %22 = vst [vmem:[#allocation2 + $0x18] sm:$0xff] 0.0
  $region17: #{hybrid_wann_gpt_forward.21} parent=0 // pred_fallthru
    _
  %v23 = vld [vmem:[#allocation2] sm:$0xff]
  %v24 = vld [vmem:[#allocation2 + $0x8] sm:$0xff]
  %v25 = vld [vmem:[#allocation2 + $0x10] sm:$0xff]
  %v26 = vld [vmem:[#allocation2 + $0x18] sm:$0xff]
  %v27 = vld [vmem:[%s0] sm:$0xf]
  %v28 = vld [vmem:[%s0 + $0x4] sm:$0xf]
  %v29 = vld [vmem:[%s1] sm:$0xff]
  %v30 = vld [vmem:[%s1 + $0x8] sm:$0xff]
  %v31 = vld [vmem:[%s1 + $0x10] sm:$0xff]
  %v32 = vld [vmem:[%s1 + $0x18] sm:$0xff]
  %v33 = vld [vmem:[%s1 + $0x20] sm:$0xff]
  %v34 = vld [vmem:[%s1 + $0x28] sm:$0xff]
  %v35 = vld [vmem:[%s1 + $0x30] sm:$0xff]
  %v36 = vld [vmem:[%s1 + $0x38] sm:$0xff]
  %v39 = vunpack.c.l.b16 %v27
  %v40 = vunpack.c.l.b16 %v28
  %v41 = vpack.c.b16 %v40, %v39
  %v50 = vunpack.c.l.b16 %v29
  %v51 = vunpack.c.h.b16 %v29
  %v52 = vunpack.c.l.b16 %v30
  %v53 = vunpack.c.h.b16 %v30
  %v54 = vunpack.c.l.b16 %v31
  %v55 = vunpack.c.h.b16 %v31
  %v56 = vunpack.c.l.b16 %v32
  %v57 = vunpack.c.h.b16 %v32
  %v58 = vunpack.c.l.b16 %v33
  %v59 = vunpack.c.h.b16 %v33
  %v60 = vunpack.c.l.b16 %v34
  %v61 = vunpack.c.h.b16 %v34
  %v62 = vunpack.c.l.b16 %v35
  %v63 = vunpack.c.h.b16 %v35
  %v64 = vunpack.c.l.b16 %v36
  %v65 = vunpack.c.h.b16 %v36
  %v66 = vpack.c.b16 %v52, %v50
  %v67 = vpack.c.b16 %v53, %v51
  %v68 = vpack.c.b16 %v56, %v54
  %v69 = vpack.c.b16 %v57, %v55
  %v70 = vpack.c.b16 %v60, %v58
  %v71 = vpack.c.b16 %v61, %v59
  %v72 = vpack.c.b16 %v64, %v62
  %v73 = vpack.c.b16 %v65, %v63
  %vm82 = vcmask 523264
  %v84 = vsel %vm82, %v41, 0
  %86 = vmatprep.subr.bf16.mxu0 %v67
  %87 = vmatpush1.bf16.msra.mxu0 %v66
  %88 = vmatprep.subr.bf16.mxu0 %v69
  %89 = vmatpush1.bf16.msra.mxu0 %v68
  %90 = vmatprep.subr.bf16.mxu0 %v71
  %91 = vmatpush1.bf16.msra.mxu0 %v70
  %92 = vmatprep.subr.bf16.mxu0 %v73
  %93 = vmatpush1.bf16.msra.mxu0 %v72
  %94 = vmatprep.subr.bf16.mxu0 0
  %95 = vmatpush1.bf16.msra.mxu0 0
  %96 = vmatprep.subr.bf16.mxu0 0
  %97 = vmatpush1.bf16.msra.mxu0 0
  %98 = vmatprep.subr.bf16.mxu0 0
  %99 = vmatpush1.bf16.msra.mxu0 0
  %100 = vmatprep.subr.bf16.mxu0 0
  %101 = vmatpush1.bf16.msra.mxu0 0
  %102 = vmatprep.subr.bf16.mxu0 0
  %103 = vmatpush1.bf16.msra.mxu0 0
  %104 = vmatprep.subr.bf16.mxu0 0
  %105 = vmatpush1.bf16.msra.mxu0 0
  %106 = vmatprep.subr.bf16.mxu0 0
  %107 = vmatpush1.bf16.msra.mxu0 0
  %108 = vmatprep.subr.bf16.mxu0 0
  %109 = vmatpush1.bf16.msra.mxu0 0
  %110 = vmatprep.subr.bf16.mxu0 0
  %111 = vmatpush1.bf16.msra.mxu0 0
  %112 = vmatprep.subr.bf16.mxu0 0
  %113 = vmatpush1.bf16.msra.mxu0 0
  %114 = vmatprep.subr.bf16.mxu0 0
  %115 = vmatpush1.bf16.msra.mxu0 0
  %116 = vmatprep.subr.bf16.mxu0 0
  %117 = vmatpush1.bf16.msra.mxu0 0
  %118 = vmatprep.mubr.bf16.mxu0 0
  %119 = vmatmul.mubr.bf16.gmra.mrb[0].mxu0 %v84
  %v120 = vpop.f32.mrb[0].mxu0
  %v121 = vadd.f32 0.0, %v120
  %v122 = vpop.f32.mrb[0].mxu0
  %v123 = vadd.f32 0.0, %v122
  %v124 = vpop.f32.mrb[0].mxu0
  %v125 = vadd.f32 0.0, %v124
  %v126 = vpop.f32.mrb[0].mxu0
  %v127 = vadd.f32 0.0, %v126
  %128 = vdwg.mxu0
  %v129 = vadd.f32 %v23, %v121
  %v130 = vadd.f32 %v24, %v123
  %v131 = vadd.f32 %v25, %v125
  %v132 = vadd.f32 %v26, %v127
  %133 = vst [vmem:[#allocation2] sm:$0xff] %v129
  %134 = vst [vmem:[#allocation2 + $0x8] sm:$0xff] %v130
  %135 = vst [vmem:[#allocation2 + $0x10] sm:$0xff] %v131
  %136 = vst [vmem:[#allocation2 + $0x18] sm:$0xff] %v132
  // Predicated region
  $region18: #{hybrid_wann_gpt_forward.21} parent=0 // pred_check
    %p137 = pneg %p15
  $region19: #{hybrid_wann_gpt_forward.21} parent=0 // pred_check_branch
    %139 = sbr.rel (%p137) target = $region21
  $region20: #{hybrid_wann_gpt_forward.21} parent=0 // pred_region
    %v140 = vld [vmem:[#allocation2] sm:$0xff]
    %v141 = vld [vmem:[#allocation2 + $0x8] sm:$0xff]
    %v142 = vld [vmem:[#allocation2 + $0x10] sm:$0xff]
    %v143 = vld [vmem:[#allocation2 + $0x18] sm:$0xff]
    %v144 = vld [vmem:[%s2] sm:$0x3]
    %v146 = vlaneseq
    %v147 = vshrl.u32 %v146, 7
    %v148 = vsub.s32 0, %v147
    %v149 = vrot.slane %v144, %v148
    %v150 = vlaneseq
    %v151 = vshrl.u32 %v150, 7
    %v152 = vsub.s32 1, %v151
    %v153 = vrot.slane %v144, %v152
    %v156 = vadd.f32 %v140, %v149
    %v157 = vadd.f32 %v141, %v153
    %v158 = vadd.f32 %v142, %v149
    %v159 = vadd.f32 %v143, %v153
    %v160 = vmul.f32 %v156, 0.5
    %v161 = vmul.f32 %v157, 0.5
    %v162 = vmul.f32 %v158, 0.5
    %v163 = vmul.f32 %v159, 0.5
    %v164 = vmul.f32 %v156, 0.044715
    %v165 = vmul.f32 %v157, 0.044715
    %v166 = vmul.f32 %v158, 0.044715
    %v167 = vmul.f32 %v159, 0.044715
    %v168 = vmul.f32 %v164, %v156
    %v169 = vmul.f32 %v165, %v157
    %v170 = vmul.f32 %v166, %v158
    %v171 = vmul.f32 %v167, %v159
    %v172 = vmul.f32 %v168, %v156
    %v173 = vmul.f32 %v169, %v157
    %v174 = vmul.f32 %v170, %v158
    %v175 = vmul.f32 %v171, %v159
    %v176 = vadd.f32 %v156, %v172
    %v177 = vadd.f32 %v157, %v173
    %v178 = vadd.f32 %v158, %v174
    %v179 = vadd.f32 %v159, %v175
    %v180 = vmul.f32 %v176, 0.7978846
    %v181 = vmul.f32 %v177, 0.7978846
    %v182 = vmul.f32 %v178, 0.7978846
    %v183 = vmul.f32 %v179, 0.7978846
    %v184 = vtanh.pop %v180
    %v185 = vtanh.pop %v181
    %v186 = vtanh.pop %v182
    %v187 = vtanh.pop %v183
    %v188 = vadd.f32 %v184, 1.0
    %v189 = vadd.f32 %v185, 1.0
    %v190 = vadd.f32 %v186, 1.0
    %v191 = vadd.f32 %v187, 1.0
    %v192 = vmul.f32 %v160, %v188
    %v193 = vmul.f32 %v161, %v189
    %v194 = vmul.f32 %v162, %v190
    %v195 = vmul.f32 %v163, %v191
    %v196 = vpack.c.bf16 %v194, %v192
    %v197 = vpack.c.bf16 %v195, %v193
    %v200 = vunpack.c.l.b16 %v196
    %v201 = vunpack.c.l.b16 %v197
    %v202 = vunpack.c.h.b16 %v196
    %v203 = vunpack.c.h.b16 %v197
    %v204 = vpack.c.b16 %v201, %v200
    %v205 = vpack.c.b16 %v203, %v202
    %208 = vst [vmem:[%s3] sm:$0xff] %v204
    %209 = vst [vmem:[%s3 + $0x8] sm:$0xff] %v205
  $region21: #{hybrid_wann_gpt_forward.21} parent=0 // pred_fallthru
    _
  // Predicated region
  $region22: #{hybrid_wann_gpt_forward.21} parent=0 // pred_check
    _
  $region23: #{hybrid_wann_gpt_forward.21} parent=0 // pred_check_branch
    %211 = sbr.rel (0) target = $region25
  $region24: #{hybrid_wann_gpt_forward.21} parent=0 // pred_region
    _
  $region25: #{hybrid_wann_gpt_forward.21} parent=0 // pred_fallthru
    _
  // Predicated region
  $region26: #{hybrid_wann_gpt_forward.21} parent=0 // pred_check
    _
  $region27: #{hybrid_wann_gpt_forward.21} parent=0 // pred_check_branch
    %213 = sbr.rel (0) target = $region29
  $region28: #{hybrid_wann_gpt_forward.21} parent=0 // pred_region
    _
  $region29: #{hybrid_wann_gpt_forward.21} parent=0 // pred_fallthru
    _

// kernel: hybrid_wann_gpt_forward.22
$region0: #{hybrid_wann_gpt_forward.22}
  #allocation0 [shape = 'u32[]', space=smem, size = 0x4, offset = 0x4, fixed_abs, tag = 'smem constant byte address 0x4 - core index']
  #allocation1 [shape = 'u32[144,128]{1,0:T(1,128)}', space=vmem, size = 0x12000, scoped, tag = 'internal scratch']
  #allocation2 [shape = 'f32[16,64]{1,0:T(8,128)}', space=vmem, size = 0x2000, scoped, tag = 'scratch operand']
  %s0 = inlined_call_operand.vmem [shape: bf16[16,256], index: 0, kind: input, shape index: {}]
  %s1 = inlined_call_operand.vmem [shape: bf16[256,64], index: 1, kind: input, shape index: {}]
  %s2 = inlined_call_operand.vmem [shape: f32[1,64], index: 2, kind: input, shape index: {}]
  %s3 = inlined_call_operand.vmem [shape: bf16[16,64], index: 3, kind: input, shape index: {}]
  %s4 = inlined_call_operand.vmem [shape: bf16[16,64], index: 4, kind: output, shape index: {}]
  %s5 = sld [smem:[#allocation0]]
  $region34: #{hybrid_wann_gpt_forward.22} parent=0
    _
  %s7 = ssub.s32 1, %s5
  %s8 = scalar_select 0, %s7, %s5
  // Predicated region
  $region2: #{hybrid_wann_gpt_forward.22} parent=0 // pred_check
    _
  $region3: #{hybrid_wann_gpt_forward.22} parent=0 // pred_check_branch
    %10 = sbr.rel (0) target = $region5
  $region4: #{hybrid_wann_gpt_forward.22} parent=0 // pred_region
    _
  $region5: #{hybrid_wann_gpt_forward.22} parent=0 // pred_fallthru
    _
  // Predicated region
  $region6: #{hybrid_wann_gpt_forward.22} parent=0 // pred_check
    _
  $region7: #{hybrid_wann_gpt_forward.22} parent=0 // pred_check_branch
    %12 = sbr.rel (0) target = $region9
  $region8: #{hybrid_wann_gpt_forward.22} parent=0 // pred_region
    _
  $region9: #{hybrid_wann_gpt_forward.22} parent=0 // pred_fallthru
    _
  // Predicated region
  $region10: #{hybrid_wann_gpt_forward.22} parent=0 // pred_check
    _
  $region11: #{hybrid_wann_gpt_forward.22} parent=0 // pred_check_branch
    %14 = sbr.rel (0) target = $region13
  $region12: #{hybrid_wann_gpt_forward.22} parent=0 // pred_region
    _
  $region13: #{hybrid_wann_gpt_forward.22} parent=0 // pred_fallthru
    _
  // Predicated region
  $region14: #{hybrid_wann_gpt_forward.22} parent=0 // pred_check
    _
  $region15: #{hybrid_wann_gpt_forward.22} parent=0 // pred_check_branch
    %16 = sbr.rel (0) target = $region17
  $region16: #{hybrid_wann_gpt_forward.22} parent=0 // pred_region
    _
  $region17: #{hybrid_wann_gpt_forward.22} parent=0 // pred_fallthru
    _
  %p18 = scmp.eq.s32.totalorder 0, 0
  // Predicated region
  $region18: #{hybrid_wann_gpt_forward.22} parent=0 // pred_check
    %p19 = pneg %p18
  $region19: #{hybrid_wann_gpt_forward.22} parent=0 // pred_check_branch
    %21 = sbr.rel (%p19) target = $region21
  $region20: #{hybrid_wann_gpt_forward.22} parent=0 // pred_region
    %vm22 = vcmask 523264
    %23 = vst.msk [vmem:[#allocation2] sm:$0xff] %vm22, 0.0
    %24 = vst.msk [vmem:[#allocation2 + $0x8] sm:$0xff] %vm22, 0.0
  $region21: #{hybrid_wann_gpt_forward.22} parent=0 // pred_fallthru
    _
  %v25 = vld [vmem:[#allocation2] sm:$0xff]
  %v26 = vld [vmem:[#allocation2 + $0x8] sm:$0xff]
  %v27 = vld [vmem:[%s0] sm:$0xff]
  %v28 = vld [vmem:[%s0 + $0x8] sm:$0xff]
  %v29 = vld [vmem:[%s1] sm:$0xf]
  %v30 = vld [vmem:[%s1 + $0x4] sm:$0xf]
  %v31 = vld [vmem:[%s1 + $0x8] sm:$0xf]
  %v32 = vld [vmem:[%s1 + $0xc] sm:$0xf]
  %v33 = vld [vmem:[%s1 + $0x10] sm:$0xf]
  %v34 = vld [vmem:[%s1 + $0x14] sm:$0xf]
  %v35 = vld [vmem:[%s1 + $0x18] sm:$0xf]
  %v36 = vld [vmem:[%s1 + $0x1c] sm:$0xf]
  %v37 = vld [vmem:[%s1 + $0x20] sm:$0xf]
  %v38 = vld [vmem:[%s1 + $0x24] sm:$0xf]
  %v39 = vld [vmem:[%s1 + $0x28] sm:$0xf]
  %v40 = vld [vmem:[%s1 + $0x2c] sm:$0xf]
  %v41 = vld [vmem:[%s1 + $0x30] sm:$0xf]
  %v42 = vld [vmem:[%s1 + $0x34] sm:$0xf]
  %v43 = vld [vmem:[%s1 + $0x38] sm:$0xf]
  %v44 = vld [vmem:[%s1 + $0x3c] sm:$0xf]
  %v45 = vld [vmem:[%s1 + $0x40] sm:$0xf]
  %v46 = vld [vmem:[%s1 + $0x44] sm:$0xf]
  %v47 = vld [vmem:[%s1 + $0x48] sm:$0xf]
  %v48 = vld [vmem:[%s1 + $0x4c] sm:$0xf]
  %v49 = vld [vmem:[%s1 + $0x50] sm:$0xf]
  %v50 = vld [vmem:[%s1 + $0x54] sm:$0xf]
  %v51 = vld [vmem:[%s1 + $0x58] sm:$0xf]
  %v52 = vld [vmem:[%s1 + $0x5c] sm:$0xf]
  %v53 = vld [vmem:[%s1 + $0x60] sm:$0xf]
  %v54 = vld [vmem:[%s1 + $0x64] sm:$0xf]
  %v55 = vld [vmem:[%s1 + $0x68] sm:$0xf]
  %v56 = vld [vmem:[%s1 + $0x6c] sm:$0xf]
  %v57 = vld [vmem:[%s1 + $0x70] sm:$0xf]
  %v58 = vld [vmem:[%s1 + $0x74] sm:$0xf]
  %v59 = vld [vmem:[%s1 + $0x78] sm:$0xf]
  %v60 = vld [vmem:[%s1 + $0x7c] sm:$0xf]
  %v63 = vunpack.c.l.b16 %v27
  %v64 = vunpack.c.h.b16 %v27
  %v65 = vunpack.c.l.b16 %v28
  %v66 = vunpack.c.h.b16 %v28
  %v67 = vpack.c.b16 %v65, %v63
  %v68 = vpack.c.b16 %v66, %v64
  %v103 = vunpack.c.l.b16 %v29
  %v104 = vunpack.c.l.b16 %v30
  %v105 = vunpack.c.l.b16 %v31
  %v106 = vunpack.c.l.b16 %v32
  %v107 = vunpack.c.l.b16 %v33
  %v108 = vunpack.c.l.b16 %v34
  %v109 = vunpack.c.l.b16 %v35
  %v110 = vunpack.c.l.b16 %v36
  %v111 = vunpack.c.l.b16 %v37
  %v112 = vunpack.c.l.b16 %v38
  %v113 = vunpack.c.l.b16 %v39
  %v114 = vunpack.c.l.b16 %v40
  %v115 = vunpack.c.l.b16 %v41
  %v116 = vunpack.c.l.b16 %v42
  %v117 = vunpack.c.l.b16 %v43
  %v118 = vunpack.c.l.b16 %v44
  %v119 = vunpack.c.l.b16 %v45
  %v120 = vunpack.c.l.b16 %v46
  %v121 = vunpack.c.l.b16 %v47
  %v122 = vunpack.c.l.b16 %v48
  %v123 = vunpack.c.l.b16 %v49
  %v124 = vunpack.c.l.b16 %v50
  %v125 = vunpack.c.l.b16 %v51
  %v126 = vunpack.c.l.b16 %v52
  %v127 = vunpack.c.l.b16 %v53
  %v128 = vunpack.c.l.b16 %v54
  %v129 = vunpack.c.l.b16 %v55
  %v130 = vunpack.c.l.b16 %v56
  %v131 = vunpack.c.l.b16 %v57
  %v132 = vunpack.c.l.b16 %v58
  %v133 = vunpack.c.l.b16 %v59
  %v134 = vunpack.c.l.b16 %v60
  %v135 = vpack.c.b16 %v104, %v103
  %v136 = vpack.c.b16 %v106, %v105
  %v137 = vpack.c.b16 %v108, %v107
  %v138 = vpack.c.b16 %v110, %v109
  %v139 = vpack.c.b16 %v112, %v111
  %v140 = vpack.c.b16 %v114, %v113
  %v141 = vpack.c.b16 %v116, %v115
  %v142 = vpack.c.b16 %v118, %v117
  %v143 = vpack.c.b16 %v120, %v119
  %v144 = vpack.c.b16 %v122, %v121
  %v145 = vpack.c.b16 %v124, %v123
  %v146 = vpack.c.b16 %v126, %v125
  %v147 = vpack.c.b16 %v128, %v127
  %v148 = vpack.c.b16 %v130, %v129
  %v149 = vpack.c.b16 %v132, %v131
  %v150 = vpack.c.b16 %v134, %v133
  %167 = vmatprep.subr.bf16.mxu0 0
  %168 = vmatpush1.bf16.msra.mxu0 %v135
  %169 = vmatprep.subr.bf16.mxu0 0
  %170 = vmatpush1.bf16.msra.mxu0 %v136
  %171 = vmatprep.subr.bf16.mxu0 0
  %172 = vmatpush1.bf16.msra.mxu0 %v137
  %173 = vmatprep.subr.bf16.mxu0 0
  %174 = vmatpush1.bf16.msra.mxu0 %v138
  %175 = vmatprep.subr.bf16.mxu0 0
  %176 = vmatpush1.bf16.msra.mxu0 %v139
  %177 = vmatprep.subr.bf16.mxu0 0
  %178 = vmatpush1.bf16.msra.mxu0 %v140
  %179 = vmatprep.subr.bf16.mxu0 0
  %180 = vmatpush1.bf16.msra.mxu0 %v141
  %181 = vmatprep.subr.bf16.mxu0 0
  %182 = vmatpush1.bf16.msra.mxu0 %v142
  %183 = vmatprep.subr.bf16.mxu0 0
  %184 = vmatpush1.bf16.msra.mxu0 %v143
  %185 = vmatprep.subr.bf16.mxu0 0
  %186 = vmatpush1.bf16.msra.mxu0 %v144
  %187 = vmatprep.subr.bf16.mxu0 0
  %188 = vmatpush1.bf16.msra.mxu0 %v145
  %189 = vmatprep.subr.bf16.mxu0 0
  %190 = vmatpush1.bf16.msra.mxu0 %v146
  %191 = vmatprep.subr.bf16.mxu0 0
  %192 = vmatpush1.bf16.msra.mxu0 %v147
  %193 = vmatprep.subr.bf16.mxu0 0
  %194 = vmatpush1.bf16.msra.mxu0 %v148
  %195 = vmatprep.subr.bf16.mxu0 0
  %196 = vmatpush1.bf16.msra.mxu0 %v149
  %197 = vmatprep.subr.bf16.mxu0 0
  %198 = vmatpush1.bf16.msra.mxu0 %v150
  %199 = vmatprep.mubr.bf16.mxu0 %v68
  %200 = vmatmul.mubr.bf16.gmra.mrb[0].mxu0 %v67
  %v201 = vpop.f32.mrb[0].mxu0
  %v202 = vadd.f32 0.0, %v201
  %v203 = vpop.f32.mrb[0].mxu0
  %v204 = vpop.f32.mrb[0].mxu0
  %v205 = vadd.f32 0.0, %v204
  %v206 = vpop.f32.mrb[0].mxu0
  %207 = vdwg.mxu0
  %v208 = vadd.f32 %v25, %v202
  %v209 = vadd.f32 %v26, %v205
  %vm210 = vcmask 523264
  %211 = vst.msk [vmem:[#allocation2] sm:$0xff] %vm210, %v208
  %212 = vst.msk [vmem:[#allocation2 + $0x8] sm:$0xff] %vm210, %v209
  // Predicated region
  $region22: #{hybrid_wann_gpt_forward.22} parent=0 // pred_check
    %p213 = pneg %p18
  $region23: #{hybrid_wann_gpt_forward.22} parent=0 // pred_check_branch
    %215 = sbr.rel (%p213) target = $region25
  $region24: #{hybrid_wann_gpt_forward.22} parent=0 // pred_region
    %v216 = vld [vmem:[#allocation2] sm:$0xff]
    %v217 = vld [vmem:[#allocation2 + $0x8] sm:$0xff]
    %v218 = vld [vmem:[%s2] sm:$0x1]
    %v220 = vlaneseq
    %v221 = vshrl.u32 %v220, 7
    %v222 = vsub.s32 0, %v221
    %v223 = vrot.slane %v218, %v222
    %v225 = vadd.f32 %v216, %v223
    %v226 = vadd.f32 %v217, %v223
    %v227 = vld [vmem:[%s3] sm:$0xf]
    %v228 = vld [vmem:[%s3 + $0x4] sm:$0xf]
    %v229 = vunpack.c.l.bf16 %v227
    %v230 = vunpack.c.l.bf16 %v228
    %v231 = vadd.f32 %v225, %v229
    %v232 = vadd.f32 %v226, %v230
    %v233 = vpack.c.bf16 %v232, %v231
    %v235 = vunpack.c.l.b16 %v233
    %v236 = vunpack.c.h.b16 %v233
    %v237 = vpack.c.b16 %v235, %v235
    %v238 = vpack.c.b16 %v236, %v236
    %vm241 = vcmask 519168
    %242 = vst.msk [vmem:[%s4] sm:$0xf] %vm241, %v237
    %243 = vst.msk [vmem:[%s4 + $0x4] sm:$0xf] %vm241, %v238
  $region25: #{hybrid_wann_gpt_forward.22} parent=0 // pred_fallthru
    _
  // Predicated region
  $region26: #{hybrid_wann_gpt_forward.22} parent=0 // pred_check
    _
  $region27: #{hybrid_wann_gpt_forward.22} parent=0 // pred_check_branch
    %245 = sbr.rel (0) target = $region29
  $region28: #{hybrid_wann_gpt_forward.22} parent=0 // pred_region
    _
  $region29: #{hybrid_wann_gpt_forward.22} parent=0 // pred_fallthru
    _
  // Predicated region
  $region30: #{hybrid_wann_gpt_forward.22} parent=0 // pred_check
    _
  $region31: #{hybrid_wann_gpt_forward.22} parent=0 // pred_check_branch
    %247 = sbr.rel (0) target = $region33
  $region32: #{hybrid_wann_gpt_forward.22} parent=0 // pred_region
    _
  $region33: #{hybrid_wann_gpt_forward.22} parent=0 // pred_fallthru
    _

// kernel: hybrid_wann_gpt_forward.31
$region0: #{hybrid_wann_gpt_forward.31}
  #allocation0 [shape = 'u32[]', space=smem, size = 0x4, offset = 0x4, fixed_abs, tag = 'smem constant byte address 0x4 - core index']
  #allocation1 [shape = 'u32[144,128]{1,0:T(1,128)}', space=vmem, size = 0x12000, scoped, tag = 'internal scratch']
  #allocation2 [shape = 'f32[16,256]{1,0:T(8,128)}', space=vmem, size = 0x4000, scoped, tag = 'scratch operand']
  #allocation3 [shape = 's32[1]{0}', space=sflag, size = 0x4, scoped, tag = 'scoped memory for hybrid_wann_gpt_forward.31']
  #allocation4 [shape = 'f32[1]{0:T(128)S(6)}', space=smem, size = 0x200, scoped, tag = 'prefetched SMEM operand 0']
  %s0 = inlined_call_operand.<no memory space> [shape: f32[1], index: 0, kind: input, shape index: {}]
  %s1 = inlined_call_operand.vmem [shape: bf16[16,64], index: 1, kind: input, shape index: {}]
  %s2 = inlined_call_operand.vmem [shape: bf16[256,64], index: 2, kind: input, shape index: {}]
  %s3 = inlined_call_operand.hbm [shape: f32[16,256], index: 3, kind: output, shape index: {}]
  %s4 = sld [smem:[#allocation0]]
  $region26: #{hybrid_wann_gpt_forward.31} parent=0
    _
  %s6 = ssub.s32 1, %s4
  %s7 = scalar_select 0, %s6, %s4
  %8 = sst [smem:[#allocation4]] %s0
  $region1: #{hybrid_wann_gpt_forward.31} parent=0
    #allocation5 [shape = 'u8[16384]{0}', space=vmem, size = 0x4000, scoped, tag = 'output window, operand 0, single buffered']
    #allocation6 [shape = 's32[1]{0}', space=sflag, size = 0x4, scoped, tag = 'scoped memory for hybrid_wann_gpt_forward.31']
    %9 = vsyncpa [#allocation6], 0
    // Predicated region
    $region2: #{hybrid_wann_gpt_forward.31} parent=1 // pred_check
      _
    $region3: #{hybrid_wann_gpt_forward.31} parent=1 // pred_check_branch
      %11 = sbr.rel (0) target = $region5
    $region4: #{hybrid_wann_gpt_forward.31} parent=1 // pred_region
      _
    $region5: #{hybrid_wann_gpt_forward.31} parent=1 // pred_fallthru
      _
    // Predicated region
    $region6: #{hybrid_wann_gpt_forward.31} parent=1 // pred_check
      _
    $region7: #{hybrid_wann_gpt_forward.31} parent=1 // pred_check_branch
      %13 = sbr.rel (0) target = $region9
    $region8: #{hybrid_wann_gpt_forward.31} parent=1 // pred_region
      _
    $region9: #{hybrid_wann_gpt_forward.31} parent=1 // pred_fallthru
      _
    %p15 = scmp.eq.s32.totalorder 0, 0
    // Predicated region
    $region10: #{hybrid_wann_gpt_forward.31} parent=1 // pred_check
      %p16 = pneg %p15
    $region11: #{hybrid_wann_gpt_forward.31} parent=1 // pred_check_branch
      %18 = sbr.rel (%p16) target = $region13
    $region12: #{hybrid_wann_gpt_forward.31} parent=1 // pred_region
      %19 = vst [vmem:[#allocation2] sm:$0xff] 0.0
      %20 = vst [vmem:[#allocation2 + $0x8] sm:$0xff] 0.0
      %21 = vst [vmem:[#allocation2 + $0x10] sm:$0xff] 0.0
      %22 = vst [vmem:[#allocation2 + $0x18] sm:$0xff] 0.0
    $region13: #{hybrid_wann_gpt_forward.31} parent=1 // pred_fallthru
      _
    %v23 = vld [vmem:[#allocation2] sm:$0xff]
    %v24 = vld [vmem:[#allocation2 + $0x8] sm:$0xff]
    %v25 = vld [vmem:[#allocation2 + $0x10] sm:$0xff]
    %v26 = vld [vmem:[#allocation2 + $0x18] sm:$0xff]
    %v27 = vld [vmem:[%s1] sm:$0xf]
    %v28 = vld [vmem:[%s1 + $0x4] sm:$0xf]
    %v29 = vld [vmem:[%s2] sm:$0xf]
    %v30 = vld [vmem:[%s2 + $0x4] sm:$0xf]
    %v31 = vld [vmem:[%s2 + $0x8] sm:$0xf]
    %v32 = vld [vmem:[%s2 + $0xc] sm:$0xf]
    %v33 = vld [vmem:[%s2 + $0x10] sm:$0xf]
    %v34 = vld [vmem:[%s2 + $0x14] sm:$0xf]
    %v35 = vld [vmem:[%s2 + $0x18] sm:$0xf]
    %v36 = vld [vmem:[%s2 + $0x1c] sm:$0xf]
    %v37 = vld [vmem:[%s2 + $0x20] sm:$0xf]
    %v38 = vld [vmem:[%s2 + $0x24] sm:$0xf]
    %v39 = vld [vmem:[%s2 + $0x28] sm:$0xf]
    %v40 = vld [vmem:[%s2 + $0x2c] sm:$0xf]
    %v41 = vld [vmem:[%s2 + $0x30] sm:$0xf]
    %v42 = vld [vmem:[%s2 + $0x34] sm:$0xf]
    %v43 = vld [vmem:[%s2 + $0x38] sm:$0xf]
    %v44 = vld [vmem:[%s2 + $0x3c] sm:$0xf]
    %v45 = vld [vmem:[%s2 + $0x40] sm:$0xf]
    %v46 = vld [vmem:[%s2 + $0x44] sm:$0xf]
    %v47 = vld [vmem:[%s2 + $0x48] sm:$0xf]
    %v48 = vld [vmem:[%s2 + $0x4c] sm:$0xf]
    %v49 = vld [vmem:[%s2 + $0x50] sm:$0xf]
    %v50 = vld [vmem:[%s2 + $0x54] sm:$0xf]
    %v51 = vld [vmem:[%s2 + $0x58] sm:$0xf]
    %v52 = vld [vmem:[%s2 + $0x5c] sm:$0xf]
    %v53 = vld [vmem:[%s2 + $0x60] sm:$0xf]
    %v54 = vld [vmem:[%s2 + $0x64] sm:$0xf]
    %v55 = vld [vmem:[%s2 + $0x68] sm:$0xf]
    %v56 = vld [vmem:[%s2 + $0x6c] sm:$0xf]
    %v57 = vld [vmem:[%s2 + $0x70] sm:$0xf]
    %v58 = vld [vmem:[%s2 + $0x74] sm:$0xf]
    %v59 = vld [vmem:[%s2 + $0x78] sm:$0xf]
    %v60 = vld [vmem:[%s2 + $0x7c] sm:$0xf]
    %v63 = vunpack.c.l.b16 %v27
    %v64 = vunpack.c.l.b16 %v28
    %v65 = vpack.c.b16 %v64, %v63
    %v98 = vunpack.c.l.b16 %v29
    %v99 = vunpack.c.l.b16 %v30
    %v100 = vunpack.c.l.b16 %v31
    %v101 = vunpack.c.l.b16 %v32
    %v102 = vunpack.c.l.b16 %v33
    %v103 = vunpack.c.l.b16 %v34
    %v104 = vunpack.c.l.b16 %v35
    %v105 = vunpack.c.l.b16 %v36
    %v106 = vunpack.c.l.b16 %v37
    %v107 = vunpack.c.l.b16 %v38
    %v108 = vunpack.c.l.b16 %v39
    %v109 = vunpack.c.l.b16 %v40
    %v110 = vunpack.c.l.b16 %v41
    %v111 = vunpack.c.l.b16 %v42
    %v112 = vunpack.c.l.b16 %v43
    %v113 = vunpack.c.l.b16 %v44
    %v114 = vunpack.c.l.b16 %v45
    %v115 = vunpack.c.l.b16 %v46
    %v116 = vunpack.c.l.b16 %v47
    %v117 = vunpack.c.l.b16 %v48
    %v118 = vunpack.c.l.b16 %v49
    %v119 = vunpack.c.l.b16 %v50
    %v120 = vunpack.c.l.b16 %v51
    %v121 = vunpack.c.l.b16 %v52
    %v122 = vunpack.c.l.b16 %v53
    %v123 = vunpack.c.l.b16 %v54
    %v124 = vunpack.c.l.b16 %v55
    %v125 = vunpack.c.l.b16 %v56
    %v126 = vunpack.c.l.b16 %v57
    %v127 = vunpack.c.l.b16 %v58
    %v128 = vunpack.c.l.b16 %v59
    %v129 = vunpack.c.l.b16 %v60
    %v130 = vpack.c.b16 %v99, %v98
    %v131 = vpack.c.b16 %v101, %v100
    %v132 = vpack.c.b16 %v103, %v102
    %v133 = vpack.c.b16 %v105, %v104
    %v134 = vpack.c.b16 %v107, %v106
    %v135 = vpack.c.b16 %v109, %v108
    %v136 = vpack.c.b16 %v111, %v110
    %v137 = vpack.c.b16 %v113, %v112
    %v138 = vpack.c.b16 %v115, %v114
    %v139 = vpack.c.b16 %v117, %v116
    %v140 = vpack.c.b16 %v119, %v118
    %v141 = vpack.c.b16 %v121, %v120
    %v142 = vpack.c.b16 %v123, %v122
    %v143 = vpack.c.b16 %v125, %v124
    %v144 = vpack.c.b16 %v127, %v126
    %v145 = vpack.c.b16 %v129, %v128
    %vm146 = vcmask 523264
    %v148 = vsel %vm146, %v65, 0
    %v151 = vsel %vm146, %v130, 0
    %v154 = vsel %vm146, %v131, 0
    %v157 = vsel %vm146, %v132, 0
    %v160 = vsel %vm146, %v133, 0
    %v163 = vsel %vm146, %v134, 0
    %v166 = vsel %vm146, %v135, 0
    %v169 = vsel %vm146, %v136, 0
    %v172 = vsel %vm146, %v137, 0
    %v175 = vsel %vm146, %v138, 0
    %v178 = vsel %vm146, %v139, 0
    %v181 = vsel %vm146, %v140, 0
    %v184 = vsel %vm146, %v141, 0
    %v187 = vsel %vm146, %v142, 0
    %v190 = vsel %vm146, %v143, 0
    %v193 = vsel %vm146, %v144, 0
    %v196 = vsel %vm146, %v145, 0
    %198 = vmatprep.subr.bf16.mxu0 0
    %199 = vmatpush1.bf16.xpose.msra.mxu0 %v151
    %200 = vmatprep.subr.bf16.mxu0 0
    %201 = vmatpush1.bf16.xpose.msra.mxu0 %v154
    %202 = vmatprep.subr.bf16.mxu0 0
    %203 = vmatpush1.bf16.xpose.msra.mxu0 %v157
    %204 = vmatprep.subr.bf16.mxu0 0
    %205 = vmatpush1.bf16.xpose.msra.mxu0 %v160
    %206 = vmatprep.subr.bf16.mxu0 0
    %207 = vmatpush1.bf16.xpose.msra.mxu0 %v163
    %208 = vmatprep.subr.bf16.mxu0 0
    %209 = vmatpush1.bf16.xpose.msra.mxu0 %v166
    %210 = vmatprep.subr.bf16.mxu0 0
    %211 = vmatpush1.bf16.xpose.msra.mxu0 %v169
    %212 = vmatprep.subr.bf16.mxu0 0
    %213 = vmatpush1.bf16.xpose.msra.mxu0 %v172
    %214 = vmatprep.subr.bf16.mxu0 0
    %215 = vmatpush1.bf16.xpose.msra.mxu0 %v175
    %216 = vmatprep.subr.bf16.mxu0 0
    %217 = vmatpush1.bf16.xpose.msra.mxu0 %v178
    %218 = vmatprep.subr.bf16.mxu0 0
    %219 = vmatpush1.bf16.xpose.msra.mxu0 %v181
    %220 = vmatprep.subr.bf16.mxu0 0
    %221 = vmatpush1.bf16.xpose.msra.mxu0 %v184
    %222 = vmatprep.subr.bf16.mxu0 0
    %223 = vmatpush1.bf16.xpose.msra.mxu0 %v187
    %224 = vmatprep.subr.bf16.mxu0 0
    %225 = vmatpush1.bf16.xpose.msra.mxu0 %v190
    %226 = vmatprep.subr.bf16.mxu0 0
    %227 = vmatpush1.bf16.xpose.msra.mxu0 %v193
    %228 = vmatprep.subr.bf16.mxu0 0
    %229 = vmatpush1.bf16.xpose.msra.mxu0 %v196
    %230 = vmatprep.mubr.bf16.mxu0 0
    %231 = vmatmul.mubr.bf16.gmra.mrb[0].mxu0 %v148
    %v232 = vpop.f32.mrb[0].mxu0
    %v233 = vadd.f32 0.0, %v232
    %v234 = vpop.f32.mrb[0].mxu0
    %v235 = vadd.f32 0.0, %v234
    %v236 = vpop.f32.mrb[0].mxu0
    %v237 = vadd.f32 0.0, %v236
    %v238 = vpop.f32.mrb[0].mxu0
    %v239 = vadd.f32 0.0, %v238
    %240 = vdwg.mxu0
    %v241 = vadd.f32 %v23, %v233
    %v242 = vadd.f32 %v24, %v235
    %v243 = vadd.f32 %v25, %v237
    %v244 = vadd.f32 %v26, %v239
    %245 = vst [vmem:[#allocation2] sm:$0xff] %v241
    %246 = vst [vmem:[#allocation2 + $0x8] sm:$0xff] %v242
    %247 = vst [vmem:[#allocation2 + $0x10] sm:$0xff] %v243
    %248 = vst [vmem:[#allocation2 + $0x18] sm:$0xff] %v244
    // Predicated region
    $region14: #{hybrid_wann_gpt_forward.31} parent=1 // pred_check
      %p249 = pneg %p15
    $region15: #{hybrid_wann_gpt_forward.31} parent=1 // pred_check_branch
      %251 = sbr.rel (%p249) target = $region17
    $region16: #{hybrid_wann_gpt_forward.31} parent=1 // pred_region
      %v252 = vld [vmem:[#allocation2] sm:$0xff]
      %v253 = vld [vmem:[#allocation2 + $0x8] sm:$0xff]
      %v254 = vld [vmem:[#allocation2 + $0x10] sm:$0xff]
      %v255 = vld [vmem:[#allocation2 + $0x18] sm:$0xff]
      %s256 = sld [smem:[#allocation4]]
      %v257 = vstv %s256
      %v258 = vmul.f32 %v252, %v257
      %v259 = vmul.f32 %v253, %v257
      %v260 = vmul.f32 %v254, %v257
      %v261 = vmul.f32 %v255, %v257
      %262 = vst [vmem:[#allocation5] sm:$0xff] %v258
      %263 = vst [vmem:[#allocation5 + $0x8] sm:$0xff] %v259
      %264 = vst [vmem:[#allocation5 + $0x10] sm:$0xff] %v260
      %265 = vst [vmem:[#allocation5 + $0x18] sm:$0xff] %v261
    $region17: #{hybrid_wann_gpt_forward.31} parent=1 // pred_fallthru
      _
    // Predicated region
    $region18: #{hybrid_wann_gpt_forward.31} parent=1 // pred_check
      _
    $region19: #{hybrid_wann_gpt_forward.31} parent=1 // pred_check_branch
      %267 = sbr.rel (0) target = $region21
    $region20: #{hybrid_wann_gpt_forward.31} parent=1 // pred_region
      %s269 = ssub.s32 512, 512
      %270 = vsyncadd [#allocation6], %s269
      %s271 = sshll.u32 [#allocation5], 4
      %s272 = int_to_ptr.vmem [resolvable:$true] %s271
      %277 = dma.vmem_to_hbm [thread:$0]  %s272, 512, %s3, [#allocation6], 256, 256, 16
    $region21: #{hybrid_wann_gpt_forward.31} parent=1 // pred_fallthru
      _
    // Predicated region
    $region22: #{hybrid_wann_gpt_forward.31} parent=1 // pred_check
      _
    $region23: #{hybrid_wann_gpt_forward.31} parent=1 // pred_check_branch
      %279 = sbr.rel (0) target = $region25
    $region24: #{hybrid_wann_gpt_forward.31} parent=1 // pred_region
      %280 = dma.done [#allocation6], 512
    $region25: #{hybrid_wann_gpt_forward.31} parent=1 // pred_fallthru
      _
    %281 = vsyncpa [#allocation6], 1

</llo_original>
